<compile_context>
chip_gen: v7x
topology: tpu7x:2x2x1
jax: 0.10.0
libtpu: 0.0.40
codegen_flags: <defaults>
</compile_context>

<pallas_src>
import functools

import jax
import jax.numpy as jnp
from jax import lax
from jax.experimental import pallas as pl
from jax.experimental.pallas import tpu as pltpu

EPS = 1e-5  # PyTorch LayerNorm default


def _time_tile(T, C_in, C_out, F, max_tile=256, vmem_budget=24 * 1024 * 1024):
    """Largest multiple-of-8 divisor of T <= max_tile fitting the VMEM budget."""
    if T % 8 != 0:
        # Full-extent time block is the only legal option (block dim == array dim).
        return T

    def fits(tt):
        # input + output blocks, f32, double-buffered.
        return 2 * 4 * tt * F * (C_in + C_out) <= vmem_budget

    best = 8
    tt = 8
    while tt <= min(T, max_tile):
        if T % tt == 0 and fits(tt):
            best = tt
        tt += 8
    return best


def _row_chunk(TT, F, C_out, vreg_budget=48):
    """Rows per inner chunk: keep (C_out accumulators + x slab + temps) in vregs."""
    if TT % 8 != 0:
        return TT
    lane_tiles = pl.cdiv(F, 128)
    groups = max(1, vreg_budget // ((C_out + 2) * lane_tiles))  # 8-row groups/slab
    rc = min(TT, groups * 8)
    rc -= rc % 8
    rc = max(rc, 8)
    while TT % rc != 0:
        rc -= 8
    return rc


def _generator_kernel(x_ref, w_ref, b_ref, alpha_ref, gamma_ref, beta_ref, o_ref,
                      *, C_in, C_out, F, TT, RC):
    # x_ref:     (C_in, TT, F)   VMEM block of the NCHW input
    # w_ref:     (C_out, C_in)   SMEM 1x1 conv weight
    # b_ref:     (C_out,)        SMEM conv bias
    # alpha_ref: (1,)            SMEM PReLU slope
    # gamma_ref: (C_out, F)      VMEM LayerNorm weight (resident)
    # beta_ref:  (C_out, F)      VMEM LayerNorm bias   (resident)
    # o_ref:     (C_out, TT, F)  VMEM output block
    alpha = alpha_ref[0]
    bias = [b_ref[o] for o in range(C_out)]
    inv_n = 1.0 / float(C_out * F)
    n_chunks = TT // RC

    def process_chunk(r0):
        # ---- 1x1 conv: each x[c] slab is loaded from VMEM exactly once and
        #      broadcast-MAC'd into all C_out accumulators (VPU). ----
        accs = [jnp.full((RC, F), bias[o], dtype=jnp.float32) for o in range(C_out)]
        for c in range(C_in):
            xc = x_ref[c, pl.ds(r0, RC), :]
            for o in range(C_out):
                accs[o] = accs[o] + w_ref[o, c] * xc

        # ---- PReLU ----
        ys = [jnp.where(a >= 0.0, a, alpha * a) for a in accs]

        # ---- fused LayerNorm statistics: per time row, over (C_out, F) ----
        tot = ys[0]
        sq = ys[0] * ys[0]
        for o in range(1, C_out):
            tot = tot + ys[o]
            sq = sq + ys[o] * ys[o]
        s1 = jnp.sum(tot, axis=1, keepdims=True)            # (RC, 1) lane-reduce (XLU)
        s2 = jnp.sum(sq, axis=1, keepdims=True)             # (RC, 1)
        mean = s1 * inv_n
        var = jnp.maximum(s2 * inv_n - mean * mean, 0.0)
        inv_std = lax.rsqrt(var + EPS)

        # ---- normalize + affine, write the (sublane-dense) output block ----
        for o in range(C_out):
            g = gamma_ref[o:o + 1, :]                       # (1, F)
            bt = beta_ref[o:o + 1, :]                       # (1, F)
            o_ref[o, pl.ds(r0, RC), :] = (ys[o] - mean) * inv_std * g + bt

    if n_chunks <= 2:
        # Short trip count: unroll statically (static slices, full LLO visibility).
        for ci in range(n_chunks):
            process_chunk(ci * RC)
    else:
        # Longer trip count: fori_loop bounds live vreg ranges and code size.
        def body(ci, carry):
            process_chunk(pl.multiple_of(ci * RC, RC))
            return carry
        lax.fori_loop(0, n_chunks, body, 0)


def generator_forward(x, w, b, alpha, gamma, beta):
    """x: (B, C_in, T, F) f32 -> (B, C_out, T, F) f32 (no wrapper transposes)."""
    B, C_in, T, F = x.shape
    C_out = w.shape[0]
    TT = _time_tile(T, C_in, C_out, F)
    assert T % TT == 0, "time tile must divide T"
    RC = _row_chunk(TT, F, C_out)

    w_s = jnp.asarray(w, jnp.float32)                       # (C_out, C_in)
    b_s = jnp.asarray(b, jnp.float32).reshape(C_out)        # (C_out,)
    alpha_s = jnp.asarray(alpha, jnp.float32).reshape(1)    # (1,)
    gamma_s = jnp.asarray(gamma, jnp.float32)               # (C_out, F)
    beta_s = jnp.asarray(beta, jnp.float32)                 # (C_out, F)

    kernel = functools.partial(_generator_kernel, C_in=C_in, C_out=C_out, F=F,
                               TT=TT, RC=RC)

    return pl.pallas_call(
        kernel,
        out_shape=jax.ShapeDtypeStruct((B, C_out, T, F), jnp.float32),
        grid_spec=pltpu.PrefetchScalarGridSpec(
            num_scalar_prefetch=0,
            grid=(B, T // TT),
            in_specs=[
                # NCHW input blocked directly: (C_in, TT, F) per (b, time-chunk).
                pl.BlockSpec((None, C_in, TT, F), lambda bi, ti: (bi, 0, ti, 0)),
                pl.BlockSpec(memory_space=pltpu.MemorySpace.SMEM),   # w
                pl.BlockSpec(memory_space=pltpu.MemorySpace.SMEM),   # b
                pl.BlockSpec(memory_space=pltpu.MemorySpace.SMEM),   # alpha
                pl.BlockSpec((C_out, F), lambda bi, ti: (0, 0)),     # gamma (resident)
                pl.BlockSpec((C_out, F), lambda bi, ti: (0, 0)),     # beta  (resident)
            ],
            out_specs=pl.BlockSpec((None, C_out, TT, F),
                                   lambda bi, ti: (bi, 0, ti, 0)),
        ),
        compiler_params=pltpu.CompilerParams(
            dimension_semantics=("parallel", "parallel"),
            vmem_limit_bytes=32 * 1024 * 1024,
        ),
    )(x, w_s, b_s, alpha_s, gamma_s, beta_s)


def reference_forward(x, w, b, alpha, gamma, beta):
    """Pure-JAX reference matching the PyTorch module (full f32 precision)."""
    y = jnp.einsum("oc,bctf->botf", w, x,
                   precision=lax.Precision.HIGHEST) + b[None, :, None, None]
    y = jnp.where(y >= 0, y, alpha * y)
    y_t = jnp.transpose(y, (0, 2, 1, 3))                    # (B, T, C_out, F)
    mean = jnp.mean(y_t, axis=(-2, -1), keepdims=True)
    var = jnp.mean((y_t - mean) ** 2, axis=(-2, -1), keepdims=True)
    y_t = (y_t - mean) / jnp.sqrt(var + EPS)
    y_t = y_t * gamma[None, None] + beta[None, None]
    return jnp.transpose(y_t, (0, 2, 1, 3))


if __name__ == "__main__":
    # Small shapes consistent with the module defaults (input_dim=32, output_dim=4,
    # F=129), batch=2, T=8.
    B, T = 2, 8
    C_in, C_out, F = 32, 4, 129

    key = jax.random.PRNGKey(0)
    kx, kw, kb = jax.random.split(key, 3)

    x = jax.random.normal(kx, (B, C_in, T, F), dtype=jnp.float32)

    # Deterministic parameter init (shapes from nn.Conv2d / nn.PReLU / nn.LayerNorm).
    bound = 1.0 / (C_in ** 0.5)
    w = jax.random.uniform(kw, (C_out, C_in), jnp.float32, -bound, bound)  # 1x1 kernel
    b = jax.random.uniform(kb, (C_out,), jnp.float32, -bound, bound)
    alpha = jnp.float32(0.25)                     # PReLU default
    gamma = jnp.ones((C_out, F), jnp.float32)     # LayerNorm default weight
    beta = jnp.zeros((C_out, F), jnp.float32)     # LayerNorm default bias

    out = generator_forward(x, w, b, alpha, gamma, beta)
    out = jax.block_until_ready(out)

    ref = reference_forward(x, w, b, alpha, gamma, beta)
    assert out.shape == (B, C_out, T, F)
    assert jnp.allclose(out, ref, atol=1e-4, rtol=1e-4)

    print("KERNEL_OK")
</pallas_src>

<mosaic_0001>
module attributes {stable_mosaic.version = 11 : i64} {
  func.func @_generator_kernel(%arg0: i32, %arg1: i32, %arg2: memref<1x32x8x129xf32, #tpu.memory_space<vmem>>, %arg3: memref<4x32xf32, #tpu.memory_space<smem>>, %arg4: memref<4xf32, #tpu.memory_space<smem>>, %arg5: memref<1xf32, #tpu.memory_space<smem>>, %arg6: memref<4x129xf32, #tpu.memory_space<vmem>>, %arg7: memref<4x129xf32, #tpu.memory_space<vmem>>, %arg8: memref<1x4x8x129xf32, #tpu.memory_space<vmem>>) attributes {dimension_semantics = [#tpu.dimension_semantics<parallel>, #tpu.dimension_semantics<parallel>], iteration_bounds = array<i64: 2, 1>, scalar_prefetch = 0 : i64, scratch_operands = 0 : i64, tpu.core_type = #tpu.core_type<tc>, window_params = [{transform_indices = @transform_0, window_bounds = array<i64: 1, 32, 8, 129>}, {transform_indices = @transform_1, window_bounds = array<i64: 4, 32>}, {transform_indices = @transform_2, window_bounds = array<i64: 4>}, {transform_indices = @transform_3, window_bounds = array<i64: 1>}, {pipeline_mode = #tpu.pipeline_mode<synchronous>, transform_indices = @transform_4, window_bounds = array<i64: 4, 129>}, {pipeline_mode = #tpu.pipeline_mode<synchronous>, transform_indices = @transform_5, window_bounds = array<i64: 4, 129>}, {transform_indices = @transform_6, window_bounds = array<i64: 1, 4, 8, 129>}]} {
    %c0 = arith.constant 0 : index
    %0 = memref.load %arg5[%c0] : memref<1xf32, #tpu.memory_space<smem>>
    %c0_0 = arith.constant 0 : index
    %1 = memref.load %arg4[%c0_0] : memref<4xf32, #tpu.memory_space<smem>>
    %c1 = arith.constant 1 : index
    %2 = memref.load %arg4[%c1] : memref<4xf32, #tpu.memory_space<smem>>
    %c2 = arith.constant 2 : index
    %3 = memref.load %arg4[%c2] : memref<4xf32, #tpu.memory_space<smem>>
    %c3 = arith.constant 3 : index
    %4 = memref.load %arg4[%c3] : memref<4xf32, #tpu.memory_space<smem>>
    %5 = vector.broadcast %1 : f32 to vector<8x129xf32>
    %6 = vector.broadcast %2 : f32 to vector<8x129xf32>
    %7 = vector.broadcast %3 : f32 to vector<8x129xf32>
    %8 = vector.broadcast %4 : f32 to vector<8x129xf32>
    %c0_1 = arith.constant 0 : index
    %c0_2 = arith.constant 0 : index
    %c0_3 = arith.constant 0 : index
    %c0_4 = arith.constant 0 : index
    %9 = vector.load %arg2[%c0_1, %c0_2, %c0_3, %c0_4] : memref<1x32x8x129xf32, #tpu.memory_space<vmem>>, vector<1x1x8x129xf32>
    %10 = vector.shape_cast %9 : vector<1x1x8x129xf32> to vector<8x129xf32>
    %c0_5 = arith.constant 0 : index
    %c0_6 = arith.constant 0 : index
    %11 = memref.load %arg3[%c0_5, %c0_6] : memref<4x32xf32, #tpu.memory_space<smem>>
    %12 = vector.broadcast %11 : f32 to vector<8x129xf32>
    %13 = arith.mulf %12, %10 : vector<8x129xf32>
    %14 = arith.addf %5, %13 : vector<8x129xf32>
    %c1_7 = arith.constant 1 : index
    %c0_8 = arith.constant 0 : index
    %15 = memref.load %arg3[%c1_7, %c0_8] : memref<4x32xf32, #tpu.memory_space<smem>>
    %16 = vector.broadcast %15 : f32 to vector<8x129xf32>
    %17 = arith.mulf %16, %10 : vector<8x129xf32>
    %18 = arith.addf %6, %17 : vector<8x129xf32>
    %c2_9 = arith.constant 2 : index
    %c0_10 = arith.constant 0 : index
    %19 = memref.load %arg3[%c2_9, %c0_10] : memref<4x32xf32, #tpu.memory_space<smem>>
    %20 = vector.broadcast %19 : f32 to vector<8x129xf32>
    %21 = arith.mulf %20, %10 : vector<8x129xf32>
    %22 = arith.addf %7, %21 : vector<8x129xf32>
    %c3_11 = arith.constant 3 : index
    %c0_12 = arith.constant 0 : index
    %23 = memref.load %arg3[%c3_11, %c0_12] : memref<4x32xf32, #tpu.memory_space<smem>>
    %24 = vector.broadcast %23 : f32 to vector<8x129xf32>
    %25 = arith.mulf %24, %10 : vector<8x129xf32>
    %26 = arith.addf %8, %25 : vector<8x129xf32>
    %c0_13 = arith.constant 0 : index
    %c1_14 = arith.constant 1 : index
    %c0_15 = arith.constant 0 : index
    %c0_16 = arith.constant 0 : index
    %27 = vector.load %arg2[%c0_13, %c1_14, %c0_15, %c0_16] : memref<1x32x8x129xf32, #tpu.memory_space<vmem>>, vector<1x1x8x129xf32>
    %28 = vector.shape_cast %27 : vector<1x1x8x129xf32> to vector<8x129xf32>
    %c0_17 = arith.constant 0 : index
    %c1_18 = arith.constant 1 : index
    %29 = memref.load %arg3[%c0_17, %c1_18] : memref<4x32xf32, #tpu.memory_space<smem>>
    %30 = vector.broadcast %29 : f32 to vector<8x129xf32>
    %31 = arith.mulf %30, %28 : vector<8x129xf32>
    %32 = arith.addf %14, %31 : vector<8x129xf32>
    %c1_19 = arith.constant 1 : index
    %c1_20 = arith.constant 1 : index
    %33 = memref.load %arg3[%c1_19, %c1_20] : memref<4x32xf32, #tpu.memory_space<smem>>
    %34 = vector.broadcast %33 : f32 to vector<8x129xf32>
    %35 = arith.mulf %34, %28 : vector<8x129xf32>
    %36 = arith.addf %18, %35 : vector<8x129xf32>
    %c2_21 = arith.constant 2 : index
    %c1_22 = arith.constant 1 : index
    %37 = memref.load %arg3[%c2_21, %c1_22] : memref<4x32xf32, #tpu.memory_space<smem>>
    %38 = vector.broadcast %37 : f32 to vector<8x129xf32>
    %39 = arith.mulf %38, %28 : vector<8x129xf32>
    %40 = arith.addf %22, %39 : vector<8x129xf32>
    %c3_23 = arith.constant 3 : index
    %c1_24 = arith.constant 1 : index
    %41 = memref.load %arg3[%c3_23, %c1_24] : memref<4x32xf32, #tpu.memory_space<smem>>
    %42 = vector.broadcast %41 : f32 to vector<8x129xf32>
    %43 = arith.mulf %42, %28 : vector<8x129xf32>
    %44 = arith.addf %26, %43 : vector<8x129xf32>
    %c0_25 = arith.constant 0 : index
    %c2_26 = arith.constant 2 : index
    %c0_27 = arith.constant 0 : index
    %c0_28 = arith.constant 0 : index
    %45 = vector.load %arg2[%c0_25, %c2_26, %c0_27, %c0_28] : memref<1x32x8x129xf32, #tpu.memory_space<vmem>>, vector<1x1x8x129xf32>
    %46 = vector.shape_cast %45 : vector<1x1x8x129xf32> to vector<8x129xf32>
    %c0_29 = arith.constant 0 : index
    %c2_30 = arith.constant 2 : index
    %47 = memref.load %arg3[%c0_29, %c2_30] : memref<4x32xf32, #tpu.memory_space<smem>>
    %48 = vector.broadcast %47 : f32 to vector<8x129xf32>
    %49 = arith.mulf %48, %46 : vector<8x129xf32>
    %50 = arith.addf %32, %49 : vector<8x129xf32>
    %c1_31 = arith.constant 1 : index
    %c2_32 = arith.constant 2 : index
    %51 = memref.load %arg3[%c1_31, %c2_32] : memref<4x32xf32, #tpu.memory_space<smem>>
    %52 = vector.broadcast %51 : f32 to vector<8x129xf32>
    %53 = arith.mulf %52, %46 : vector<8x129xf32>
    %54 = arith.addf %36, %53 : vector<8x129xf32>
    %c2_33 = arith.constant 2 : index
    %c2_34 = arith.constant 2 : index
    %55 = memref.load %arg3[%c2_33, %c2_34] : memref<4x32xf32, #tpu.memory_space<smem>>
    %56 = vector.broadcast %55 : f32 to vector<8x129xf32>
    %57 = arith.mulf %56, %46 : vector<8x129xf32>
    %58 = arith.addf %40, %57 : vector<8x129xf32>
    %c3_35 = arith.constant 3 : index
    %c2_36 = arith.constant 2 : index
    %59 = memref.load %arg3[%c3_35, %c2_36] : memref<4x32xf32, #tpu.memory_space<smem>>
    %60 = vector.broadcast %59 : f32 to vector<8x129xf32>
    %61 = arith.mulf %60, %46 : vector<8x129xf32>
    %62 = arith.addf %44, %61 : vector<8x129xf32>
    %c0_37 = arith.constant 0 : index
    %c3_38 = arith.constant 3 : index
    %c0_39 = arith.constant 0 : index
    %c0_40 = arith.constant 0 : index
    %63 = vector.load %arg2[%c0_37, %c3_38, %c0_39, %c0_40] : memref<1x32x8x129xf32, #tpu.memory_space<vmem>>, vector<1x1x8x129xf32>
    %64 = vector.shape_cast %63 : vector<1x1x8x129xf32> to vector<8x129xf32>
    %c0_41 = arith.constant 0 : index
    %c3_42 = arith.constant 3 : index
    %65 = memref.load %arg3[%c0_41, %c3_42] : memref<4x32xf32, #tpu.memory_space<smem>>
    %66 = vector.broadcast %65 : f32 to vector<8x129xf32>
    %67 = arith.mulf %66, %64 : vector<8x129xf32>
    %68 = arith.addf %50, %67 : vector<8x129xf32>
    %c1_43 = arith.constant 1 : index
    %c3_44 = arith.constant 3 : index
    %69 = memref.load %arg3[%c1_43, %c3_44] : memref<4x32xf32, #tpu.memory_space<smem>>
    %70 = vector.broadcast %69 : f32 to vector<8x129xf32>
    %71 = arith.mulf %70, %64 : vector<8x129xf32>
    %72 = arith.addf %54, %71 : vector<8x129xf32>
    %c2_45 = arith.constant 2 : index
    %c3_46 = arith.constant 3 : index
    %73 = memref.load %arg3[%c2_45, %c3_46] : memref<4x32xf32, #tpu.memory_space<smem>>
    %74 = vector.broadcast %73 : f32 to vector<8x129xf32>
    %75 = arith.mulf %74, %64 : vector<8x129xf32>
    %76 = arith.addf %58, %75 : vector<8x129xf32>
    %c3_47 = arith.constant 3 : index
    %c3_48 = arith.constant 3 : index
    %77 = memref.load %arg3[%c3_47, %c3_48] : memref<4x32xf32, #tpu.memory_space<smem>>
    %78 = vector.broadcast %77 : f32 to vector<8x129xf32>
    %79 = arith.mulf %78, %64 : vector<8x129xf32>
    %80 = arith.addf %62, %79 : vector<8x129xf32>
    %c0_49 = arith.constant 0 : index
    %c4 = arith.constant 4 : index
    %c0_50 = arith.constant 0 : index
    %c0_51 = arith.constant 0 : index
    %81 = vector.load %arg2[%c0_49, %c4, %c0_50, %c0_51] : memref<1x32x8x129xf32, #tpu.memory_space<vmem>>, vector<1x1x8x129xf32>
    %82 = vector.shape_cast %81 : vector<1x1x8x129xf32> to vector<8x129xf32>
    %c0_52 = arith.constant 0 : index
    %c4_53 = arith.constant 4 : index
    %83 = memref.load %arg3[%c0_52, %c4_53] : memref<4x32xf32, #tpu.memory_space<smem>>
    %84 = vector.broadcast %83 : f32 to vector<8x129xf32>
    %85 = arith.mulf %84, %82 : vector<8x129xf32>
    %86 = arith.addf %68, %85 : vector<8x129xf32>
    %c1_54 = arith.constant 1 : index
    %c4_55 = arith.constant 4 : index
    %87 = memref.load %arg3[%c1_54, %c4_55] : memref<4x32xf32, #tpu.memory_space<smem>>
    %88 = vector.broadcast %87 : f32 to vector<8x129xf32>
    %89 = arith.mulf %88, %82 : vector<8x129xf32>
    %90 = arith.addf %72, %89 : vector<8x129xf32>
    %c2_56 = arith.constant 2 : index
    %c4_57 = arith.constant 4 : index
    %91 = memref.load %arg3[%c2_56, %c4_57] : memref<4x32xf32, #tpu.memory_space<smem>>
    %92 = vector.broadcast %91 : f32 to vector<8x129xf32>
    %93 = arith.mulf %92, %82 : vector<8x129xf32>
    %94 = arith.addf %76, %93 : vector<8x129xf32>
    %c3_58 = arith.constant 3 : index
    %c4_59 = arith.constant 4 : index
    %95 = memref.load %arg3[%c3_58, %c4_59] : memref<4x32xf32, #tpu.memory_space<smem>>
    %96 = vector.broadcast %95 : f32 to vector<8x129xf32>
    %97 = arith.mulf %96, %82 : vector<8x129xf32>
    %98 = arith.addf %80, %97 : vector<8x129xf32>
    %c0_60 = arith.constant 0 : index
    %c5 = arith.constant 5 : index
    %c0_61 = arith.constant 0 : index
    %c0_62 = arith.constant 0 : index
    %99 = vector.load %arg2[%c0_60, %c5, %c0_61, %c0_62] : memref<1x32x8x129xf32, #tpu.memory_space<vmem>>, vector<1x1x8x129xf32>
    %100 = vector.shape_cast %99 : vector<1x1x8x129xf32> to vector<8x129xf32>
    %c0_63 = arith.constant 0 : index
    %c5_64 = arith.constant 5 : index
    %101 = memref.load %arg3[%c0_63, %c5_64] : memref<4x32xf32, #tpu.memory_space<smem>>
    %102 = vector.broadcast %101 : f32 to vector<8x129xf32>
    %103 = arith.mulf %102, %100 : vector<8x129xf32>
    %104 = arith.addf %86, %103 : vector<8x129xf32>
    %c1_65 = arith.constant 1 : index
    %c5_66 = arith.constant 5 : index
    %105 = memref.load %arg3[%c1_65, %c5_66] : memref<4x32xf32, #tpu.memory_space<smem>>
    %106 = vector.broadcast %105 : f32 to vector<8x129xf32>
    %107 = arith.mulf %106, %100 : vector<8x129xf32>
    %108 = arith.addf %90, %107 : vector<8x129xf32>
    %c2_67 = arith.constant 2 : index
    %c5_68 = arith.constant 5 : index
    %109 = memref.load %arg3[%c2_67, %c5_68] : memref<4x32xf32, #tpu.memory_space<smem>>
    %110 = vector.broadcast %109 : f32 to vector<8x129xf32>
    %111 = arith.mulf %110, %100 : vector<8x129xf32>
    %112 = arith.addf %94, %111 : vector<8x129xf32>
    %c3_69 = arith.constant 3 : index
    %c5_70 = arith.constant 5 : index
    %113 = memref.load %arg3[%c3_69, %c5_70] : memref<4x32xf32, #tpu.memory_space<smem>>
    %114 = vector.broadcast %113 : f32 to vector<8x129xf32>
    %115 = arith.mulf %114, %100 : vector<8x129xf32>
    %116 = arith.addf %98, %115 : vector<8x129xf32>
    %c0_71 = arith.constant 0 : index
    %c6 = arith.constant 6 : index
    %c0_72 = arith.constant 0 : index
    %c0_73 = arith.constant 0 : index
    %117 = vector.load %arg2[%c0_71, %c6, %c0_72, %c0_73] : memref<1x32x8x129xf32, #tpu.memory_space<vmem>>, vector<1x1x8x129xf32>
    %118 = vector.shape_cast %117 : vector<1x1x8x129xf32> to vector<8x129xf32>
    %c0_74 = arith.constant 0 : index
    %c6_75 = arith.constant 6 : index
    %119 = memref.load %arg3[%c0_74, %c6_75] : memref<4x32xf32, #tpu.memory_space<smem>>
    %120 = vector.broadcast %119 : f32 to vector<8x129xf32>
    %121 = arith.mulf %120, %118 : vector<8x129xf32>
    %122 = arith.addf %104, %121 : vector<8x129xf32>
    %c1_76 = arith.constant 1 : index
    %c6_77 = arith.constant 6 : index
    %123 = memref.load %arg3[%c1_76, %c6_77] : memref<4x32xf32, #tpu.memory_space<smem>>
    %124 = vector.broadcast %123 : f32 to vector<8x129xf32>
    %125 = arith.mulf %124, %118 : vector<8x129xf32>
    %126 = arith.addf %108, %125 : vector<8x129xf32>
    %c2_78 = arith.constant 2 : index
    %c6_79 = arith.constant 6 : index
    %127 = memref.load %arg3[%c2_78, %c6_79] : memref<4x32xf32, #tpu.memory_space<smem>>
    %128 = vector.broadcast %127 : f32 to vector<8x129xf32>
    %129 = arith.mulf %128, %118 : vector<8x129xf32>
    %130 = arith.addf %112, %129 : vector<8x129xf32>
    %c3_80 = arith.constant 3 : index
    %c6_81 = arith.constant 6 : index
    %131 = memref.load %arg3[%c3_80, %c6_81] : memref<4x32xf32, #tpu.memory_space<smem>>
    %132 = vector.broadcast %131 : f32 to vector<8x129xf32>
    %133 = arith.mulf %132, %118 : vector<8x129xf32>
    %134 = arith.addf %116, %133 : vector<8x129xf32>
    %c0_82 = arith.constant 0 : index
    %c7 = arith.constant 7 : index
    %c0_83 = arith.constant 0 : index
    %c0_84 = arith.constant 0 : index
    %135 = vector.load %arg2[%c0_82, %c7, %c0_83, %c0_84] : memref<1x32x8x129xf32, #tpu.memory_space<vmem>>, vector<1x1x8x129xf32>
    %136 = vector.shape_cast %135 : vector<1x1x8x129xf32> to vector<8x129xf32>
    %c0_85 = arith.constant 0 : index
    %c7_86 = arith.constant 7 : index
    %137 = memref.load %arg3[%c0_85, %c7_86] : memref<4x32xf32, #tpu.memory_space<smem>>
    %138 = vector.broadcast %137 : f32 to vector<8x129xf32>
    %139 = arith.mulf %138, %136 : vector<8x129xf32>
    %140 = arith.addf %122, %139 : vector<8x129xf32>
    %c1_87 = arith.constant 1 : index
    %c7_88 = arith.constant 7 : index
    %141 = memref.load %arg3[%c1_87, %c7_88] : memref<4x32xf32, #tpu.memory_space<smem>>
    %142 = vector.broadcast %141 : f32 to vector<8x129xf32>
    %143 = arith.mulf %142, %136 : vector<8x129xf32>
    %144 = arith.addf %126, %143 : vector<8x129xf32>
    %c2_89 = arith.constant 2 : index
    %c7_90 = arith.constant 7 : index
    %145 = memref.load %arg3[%c2_89, %c7_90] : memref<4x32xf32, #tpu.memory_space<smem>>
    %146 = vector.broadcast %145 : f32 to vector<8x129xf32>
    %147 = arith.mulf %146, %136 : vector<8x129xf32>
    %148 = arith.addf %130, %147 : vector<8x129xf32>
    %c3_91 = arith.constant 3 : index
    %c7_92 = arith.constant 7 : index
    %149 = memref.load %arg3[%c3_91, %c7_92] : memref<4x32xf32, #tpu.memory_space<smem>>
    %150 = vector.broadcast %149 : f32 to vector<8x129xf32>
    %151 = arith.mulf %150, %136 : vector<8x129xf32>
    %152 = arith.addf %134, %151 : vector<8x129xf32>
    %c0_93 = arith.constant 0 : index
    %c8 = arith.constant 8 : index
    %c0_94 = arith.constant 0 : index
    %c0_95 = arith.constant 0 : index
    %153 = vector.load %arg2[%c0_93, %c8, %c0_94, %c0_95] : memref<1x32x8x129xf32, #tpu.memory_space<vmem>>, vector<1x1x8x129xf32>
    %154 = vector.shape_cast %153 : vector<1x1x8x129xf32> to vector<8x129xf32>
    %c0_96 = arith.constant 0 : index
    %c8_97 = arith.constant 8 : index
    %155 = memref.load %arg3[%c0_96, %c8_97] : memref<4x32xf32, #tpu.memory_space<smem>>
    %156 = vector.broadcast %155 : f32 to vector<8x129xf32>
    %157 = arith.mulf %156, %154 : vector<8x129xf32>
    %158 = arith.addf %140, %157 : vector<8x129xf32>
    %c1_98 = arith.constant 1 : index
    %c8_99 = arith.constant 8 : index
    %159 = memref.load %arg3[%c1_98, %c8_99] : memref<4x32xf32, #tpu.memory_space<smem>>
    %160 = vector.broadcast %159 : f32 to vector<8x129xf32>
    %161 = arith.mulf %160, %154 : vector<8x129xf32>
    %162 = arith.addf %144, %161 : vector<8x129xf32>
    %c2_100 = arith.constant 2 : index
    %c8_101 = arith.constant 8 : index
    %163 = memref.load %arg3[%c2_100, %c8_101] : memref<4x32xf32, #tpu.memory_space<smem>>
    %164 = vector.broadcast %163 : f32 to vector<8x129xf32>
    %165 = arith.mulf %164, %154 : vector<8x129xf32>
    %166 = arith.addf %148, %165 : vector<8x129xf32>
    %c3_102 = arith.constant 3 : index
    %c8_103 = arith.constant 8 : index
    %167 = memref.load %arg3[%c3_102, %c8_103] : memref<4x32xf32, #tpu.memory_space<smem>>
    %168 = vector.broadcast %167 : f32 to vector<8x129xf32>
    %169 = arith.mulf %168, %154 : vector<8x129xf32>
    %170 = arith.addf %152, %169 : vector<8x129xf32>
    %c0_104 = arith.constant 0 : index
    %c9 = arith.constant 9 : index
    %c0_105 = arith.constant 0 : index
    %c0_106 = arith.constant 0 : index
    %171 = vector.load %arg2[%c0_104, %c9, %c0_105, %c0_106] : memref<1x32x8x129xf32, #tpu.memory_space<vmem>>, vector<1x1x8x129xf32>
    %172 = vector.shape_cast %171 : vector<1x1x8x129xf32> to vector<8x129xf32>
    %c0_107 = arith.constant 0 : index
    %c9_108 = arith.constant 9 : index
    %173 = memref.load %arg3[%c0_107, %c9_108] : memref<4x32xf32, #tpu.memory_space<smem>>
    %174 = vector.broadcast %173 : f32 to vector<8x129xf32>
    %175 = arith.mulf %174, %172 : vector<8x129xf32>
    %176 = arith.addf %158, %175 : vector<8x129xf32>
    %c1_109 = arith.constant 1 : index
    %c9_110 = arith.constant 9 : index
    %177 = memref.load %arg3[%c1_109, %c9_110] : memref<4x32xf32, #tpu.memory_space<smem>>
    %178 = vector.broadcast %177 : f32 to vector<8x129xf32>
    %179 = arith.mulf %178, %172 : vector<8x129xf32>
    %180 = arith.addf %162, %179 : vector<8x129xf32>
    %c2_111 = arith.constant 2 : index
    %c9_112 = arith.constant 9 : index
    %181 = memref.load %arg3[%c2_111, %c9_112] : memref<4x32xf32, #tpu.memory_space<smem>>
    %182 = vector.broadcast %181 : f32 to vector<8x129xf32>
    %183 = arith.mulf %182, %172 : vector<8x129xf32>
    %184 = arith.addf %166, %183 : vector<8x129xf32>
    %c3_113 = arith.constant 3 : index
    %c9_114 = arith.constant 9 : index
    %185 = memref.load %arg3[%c3_113, %c9_114] : memref<4x32xf32, #tpu.memory_space<smem>>
    %186 = vector.broadcast %185 : f32 to vector<8x129xf32>
    %187 = arith.mulf %186, %172 : vector<8x129xf32>
    %188 = arith.addf %170, %187 : vector<8x129xf32>
    %c0_115 = arith.constant 0 : index
    %c10 = arith.constant 10 : index
    %c0_116 = arith.constant 0 : index
    %c0_117 = arith.constant 0 : index
    %189 = vector.load %arg2[%c0_115, %c10, %c0_116, %c0_117] : memref<1x32x8x129xf32, #tpu.memory_space<vmem>>, vector<1x1x8x129xf32>
    %190 = vector.shape_cast %189 : vector<1x1x8x129xf32> to vector<8x129xf32>
    %c0_118 = arith.constant 0 : index
    %c10_119 = arith.constant 10 : index
    %191 = memref.load %arg3[%c0_118, %c10_119] : memref<4x32xf32, #tpu.memory_space<smem>>
    %192 = vector.broadcast %191 : f32 to vector<8x129xf32>
    %193 = arith.mulf %192, %190 : vector<8x129xf32>
    %194 = arith.addf %176, %193 : vector<8x129xf32>
    %c1_120 = arith.constant 1 : index
    %c10_121 = arith.constant 10 : index
    %195 = memref.load %arg3[%c1_120, %c10_121] : memref<4x32xf32, #tpu.memory_space<smem>>
    %196 = vector.broadcast %195 : f32 to vector<8x129xf32>
    %197 = arith.mulf %196, %190 : vector<8x129xf32>
    %198 = arith.addf %180, %197 : vector<8x129xf32>
    %c2_122 = arith.constant 2 : index
    %c10_123 = arith.constant 10 : index
    %199 = memref.load %arg3[%c2_122, %c10_123] : memref<4x32xf32, #tpu.memory_space<smem>>
    %200 = vector.broadcast %199 : f32 to vector<8x129xf32>
    %201 = arith.mulf %200, %190 : vector<8x129xf32>
    %202 = arith.addf %184, %201 : vector<8x129xf32>
    %c3_124 = arith.constant 3 : index
    %c10_125 = arith.constant 10 : index
    %203 = memref.load %arg3[%c3_124, %c10_125] : memref<4x32xf32, #tpu.memory_space<smem>>
    %204 = vector.broadcast %203 : f32 to vector<8x129xf32>
    %205 = arith.mulf %204, %190 : vector<8x129xf32>
    %206 = arith.addf %188, %205 : vector<8x129xf32>
    %c0_126 = arith.constant 0 : index
    %c11 = arith.constant 11 : index
    %c0_127 = arith.constant 0 : index
    %c0_128 = arith.constant 0 : index
    %207 = vector.load %arg2[%c0_126, %c11, %c0_127, %c0_128] : memref<1x32x8x129xf32, #tpu.memory_space<vmem>>, vector<1x1x8x129xf32>
    %208 = vector.shape_cast %207 : vector<1x1x8x129xf32> to vector<8x129xf32>
    %c0_129 = arith.constant 0 : index
    %c11_130 = arith.constant 11 : index
    %209 = memref.load %arg3[%c0_129, %c11_130] : memref<4x32xf32, #tpu.memory_space<smem>>
    %210 = vector.broadcast %209 : f32 to vector<8x129xf32>
    %211 = arith.mulf %210, %208 : vector<8x129xf32>
    %212 = arith.addf %194, %211 : vector<8x129xf32>
    %c1_131 = arith.constant 1 : index
    %c11_132 = arith.constant 11 : index
    %213 = memref.load %arg3[%c1_131, %c11_132] : memref<4x32xf32, #tpu.memory_space<smem>>
    %214 = vector.broadcast %213 : f32 to vector<8x129xf32>
    %215 = arith.mulf %214, %208 : vector<8x129xf32>
    %216 = arith.addf %198, %215 : vector<8x129xf32>
    %c2_133 = arith.constant 2 : index
    %c11_134 = arith.constant 11 : index
    %217 = memref.load %arg3[%c2_133, %c11_134] : memref<4x32xf32, #tpu.memory_space<smem>>
    %218 = vector.broadcast %217 : f32 to vector<8x129xf32>
    %219 = arith.mulf %218, %208 : vector<8x129xf32>
    %220 = arith.addf %202, %219 : vector<8x129xf32>
    %c3_135 = arith.constant 3 : index
    %c11_136 = arith.constant 11 : index
    %221 = memref.load %arg3[%c3_135, %c11_136] : memref<4x32xf32, #tpu.memory_space<smem>>
    %222 = vector.broadcast %221 : f32 to vector<8x129xf32>
    %223 = arith.mulf %222, %208 : vector<8x129xf32>
    %224 = arith.addf %206, %223 : vector<8x129xf32>
    %c0_137 = arith.constant 0 : index
    %c12 = arith.constant 12 : index
    %c0_138 = arith.constant 0 : index
    %c0_139 = arith.constant 0 : index
    %225 = vector.load %arg2[%c0_137, %c12, %c0_138, %c0_139] : memref<1x32x8x129xf32, #tpu.memory_space<vmem>>, vector<1x1x8x129xf32>
    %226 = vector.shape_cast %225 : vector<1x1x8x129xf32> to vector<8x129xf32>
    %c0_140 = arith.constant 0 : index
    %c12_141 = arith.constant 12 : index
    %227 = memref.load %arg3[%c0_140, %c12_141] : memref<4x32xf32, #tpu.memory_space<smem>>
    %228 = vector.broadcast %227 : f32 to vector<8x129xf32>
    %229 = arith.mulf %228, %226 : vector<8x129xf32>
    %230 = arith.addf %212, %229 : vector<8x129xf32>
    %c1_142 = arith.constant 1 : index
    %c12_143 = arith.constant 12 : index
    %231 = memref.load %arg3[%c1_142, %c12_143] : memref<4x32xf32, #tpu.memory_space<smem>>
    %232 = vector.broadcast %231 : f32 to vector<8x129xf32>
    %233 = arith.mulf %232, %226 : vector<8x129xf32>
    %234 = arith.addf %216, %233 : vector<8x129xf32>
    %c2_144 = arith.constant 2 : index
    %c12_145 = arith.constant 12 : index
    %235 = memref.load %arg3[%c2_144, %c12_145] : memref<4x32xf32, #tpu.memory_space<smem>>
    %236 = vector.broadcast %235 : f32 to vector<8x129xf32>
    %237 = arith.mulf %236, %226 : vector<8x129xf32>
    %238 = arith.addf %220, %237 : vector<8x129xf32>
    %c3_146 = arith.constant 3 : index
    %c12_147 = arith.constant 12 : index
    %239 = memref.load %arg3[%c3_146, %c12_147] : memref<4x32xf32, #tpu.memory_space<smem>>
    %240 = vector.broadcast %239 : f32 to vector<8x129xf32>
    %241 = arith.mulf %240, %226 : vector<8x129xf32>
    %242 = arith.addf %224, %241 : vector<8x129xf32>
    %c0_148 = arith.constant 0 : index
    %c13 = arith.constant 13 : index
    %c0_149 = arith.constant 0 : index
    %c0_150 = arith.constant 0 : index
    %243 = vector.load %arg2[%c0_148, %c13, %c0_149, %c0_150] : memref<1x32x8x129xf32, #tpu.memory_space<vmem>>, vector<1x1x8x129xf32>
    %244 = vector.shape_cast %243 : vector<1x1x8x129xf32> to vector<8x129xf32>
    %c0_151 = arith.constant 0 : index
    %c13_152 = arith.constant 13 : index
    %245 = memref.load %arg3[%c0_151, %c13_152] : memref<4x32xf32, #tpu.memory_space<smem>>
    %246 = vector.broadcast %245 : f32 to vector<8x129xf32>
    %247 = arith.mulf %246, %244 : vector<8x129xf32>
    %248 = arith.addf %230, %247 : vector<8x129xf32>
    %c1_153 = arith.constant 1 : index
    %c13_154 = arith.constant 13 : index
    %249 = memref.load %arg3[%c1_153, %c13_154] : memref<4x32xf32, #tpu.memory_space<smem>>
    %250 = vector.broadcast %249 : f32 to vector<8x129xf32>
    %251 = arith.mulf %250, %244 : vector<8x129xf32>
    %252 = arith.addf %234, %251 : vector<8x129xf32>
    %c2_155 = arith.constant 2 : index
    %c13_156 = arith.constant 13 : index
    %253 = memref.load %arg3[%c2_155, %c13_156] : memref<4x32xf32, #tpu.memory_space<smem>>
    %254 = vector.broadcast %253 : f32 to vector<8x129xf32>
    %255 = arith.mulf %254, %244 : vector<8x129xf32>
    %256 = arith.addf %238, %255 : vector<8x129xf32>
    %c3_157 = arith.constant 3 : index
    %c13_158 = arith.constant 13 : index
    %257 = memref.load %arg3[%c3_157, %c13_158] : memref<4x32xf32, #tpu.memory_space<smem>>
    %258 = vector.broadcast %257 : f32 to vector<8x129xf32>
    %259 = arith.mulf %258, %244 : vector<8x129xf32>
    %260 = arith.addf %242, %259 : vector<8x129xf32>
    %c0_159 = arith.constant 0 : index
    %c14 = arith.constant 14 : index
    %c0_160 = arith.constant 0 : index
    %c0_161 = arith.constant 0 : index
    %261 = vector.load %arg2[%c0_159, %c14, %c0_160, %c0_161] : memref<1x32x8x129xf32, #tpu.memory_space<vmem>>, vector<1x1x8x129xf32>
    %262 = vector.shape_cast %261 : vector<1x1x8x129xf32> to vector<8x129xf32>
    %c0_162 = arith.constant 0 : index
    %c14_163 = arith.constant 14 : index
    %263 = memref.load %arg3[%c0_162, %c14_163] : memref<4x32xf32, #tpu.memory_space<smem>>
    %264 = vector.broadcast %263 : f32 to vector<8x129xf32>
    %265 = arith.mulf %264, %262 : vector<8x129xf32>
    %266 = arith.addf %248, %265 : vector<8x129xf32>
    %c1_164 = arith.constant 1 : index
    %c14_165 = arith.constant 14 : index
    %267 = memref.load %arg3[%c1_164, %c14_165] : memref<4x32xf32, #tpu.memory_space<smem>>
    %268 = vector.broadcast %267 : f32 to vector<8x129xf32>
    %269 = arith.mulf %268, %262 : vector<8x129xf32>
    %270 = arith.addf %252, %269 : vector<8x129xf32>
    %c2_166 = arith.constant 2 : index
    %c14_167 = arith.constant 14 : index
    %271 = memref.load %arg3[%c2_166, %c14_167] : memref<4x32xf32, #tpu.memory_space<smem>>
    %272 = vector.broadcast %271 : f32 to vector<8x129xf32>
    %273 = arith.mulf %272, %262 : vector<8x129xf32>
    %274 = arith.addf %256, %273 : vector<8x129xf32>
    %c3_168 = arith.constant 3 : index
    %c14_169 = arith.constant 14 : index
    %275 = memref.load %arg3[%c3_168, %c14_169] : memref<4x32xf32, #tpu.memory_space<smem>>
    %276 = vector.broadcast %275 : f32 to vector<8x129xf32>
    %277 = arith.mulf %276, %262 : vector<8x129xf32>
    %278 = arith.addf %260, %277 : vector<8x129xf32>
    %c0_170 = arith.constant 0 : index
    %c15 = arith.constant 15 : index
    %c0_171 = arith.constant 0 : index
    %c0_172 = arith.constant 0 : index
    %279 = vector.load %arg2[%c0_170, %c15, %c0_171, %c0_172] : memref<1x32x8x129xf32, #tpu.memory_space<vmem>>, vector<1x1x8x129xf32>
    %280 = vector.shape_cast %279 : vector<1x1x8x129xf32> to vector<8x129xf32>
    %c0_173 = arith.constant 0 : index
    %c15_174 = arith.constant 15 : index
    %281 = memref.load %arg3[%c0_173, %c15_174] : memref<4x32xf32, #tpu.memory_space<smem>>
    %282 = vector.broadcast %281 : f32 to vector<8x129xf32>
    %283 = arith.mulf %282, %280 : vector<8x129xf32>
    %284 = arith.addf %266, %283 : vector<8x129xf32>
    %c1_175 = arith.constant 1 : index
    %c15_176 = arith.constant 15 : index
    %285 = memref.load %arg3[%c1_175, %c15_176] : memref<4x32xf32, #tpu.memory_space<smem>>
    %286 = vector.broadcast %285 : f32 to vector<8x129xf32>
    %287 = arith.mulf %286, %280 : vector<8x129xf32>
    %288 = arith.addf %270, %287 : vector<8x129xf32>
    %c2_177 = arith.constant 2 : index
    %c15_178 = arith.constant 15 : index
    %289 = memref.load %arg3[%c2_177, %c15_178] : memref<4x32xf32, #tpu.memory_space<smem>>
    %290 = vector.broadcast %289 : f32 to vector<8x129xf32>
    %291 = arith.mulf %290, %280 : vector<8x129xf32>
    %292 = arith.addf %274, %291 : vector<8x129xf32>
    %c3_179 = arith.constant 3 : index
    %c15_180 = arith.constant 15 : index
    %293 = memref.load %arg3[%c3_179, %c15_180] : memref<4x32xf32, #tpu.memory_space<smem>>
    %294 = vector.broadcast %293 : f32 to vector<8x129xf32>
    %295 = arith.mulf %294, %280 : vector<8x129xf32>
    %296 = arith.addf %278, %295 : vector<8x129xf32>
    %c0_181 = arith.constant 0 : index
    %c16 = arith.constant 16 : index
    %c0_182 = arith.constant 0 : index
    %c0_183 = arith.constant 0 : index
    %297 = vector.load %arg2[%c0_181, %c16, %c0_182, %c0_183] : memref<1x32x8x129xf32, #tpu.memory_space<vmem>>, vector<1x1x8x129xf32>
    %298 = vector.shape_cast %297 : vector<1x1x8x129xf32> to vector<8x129xf32>
    %c0_184 = arith.constant 0 : index
    %c16_185 = arith.constant 16 : index
    %299 = memref.load %arg3[%c0_184, %c16_185] : memref<4x32xf32, #tpu.memory_space<smem>>
    %300 = vector.broadcast %299 : f32 to vector<8x129xf32>
    %301 = arith.mulf %300, %298 : vector<8x129xf32>
    %302 = arith.addf %284, %301 : vector<8x129xf32>
    %c1_186 = arith.constant 1 : index
    %c16_187 = arith.constant 16 : index
    %303 = memref.load %arg3[%c1_186, %c16_187] : memref<4x32xf32, #tpu.memory_space<smem>>
    %304 = vector.broadcast %303 : f32 to vector<8x129xf32>
    %305 = arith.mulf %304, %298 : vector<8x129xf32>
    %306 = arith.addf %288, %305 : vector<8x129xf32>
    %c2_188 = arith.constant 2 : index
    %c16_189 = arith.constant 16 : index
    %307 = memref.load %arg3[%c2_188, %c16_189] : memref<4x32xf32, #tpu.memory_space<smem>>
    %308 = vector.broadcast %307 : f32 to vector<8x129xf32>
    %309 = arith.mulf %308, %298 : vector<8x129xf32>
    %310 = arith.addf %292, %309 : vector<8x129xf32>
    %c3_190 = arith.constant 3 : index
    %c16_191 = arith.constant 16 : index
    %311 = memref.load %arg3[%c3_190, %c16_191] : memref<4x32xf32, #tpu.memory_space<smem>>
    %312 = vector.broadcast %311 : f32 to vector<8x129xf32>
    %313 = arith.mulf %312, %298 : vector<8x129xf32>
    %314 = arith.addf %296, %313 : vector<8x129xf32>
    %c0_192 = arith.constant 0 : index
    %c17 = arith.constant 17 : index
    %c0_193 = arith.constant 0 : index
    %c0_194 = arith.constant 0 : index
    %315 = vector.load %arg2[%c0_192, %c17, %c0_193, %c0_194] : memref<1x32x8x129xf32, #tpu.memory_space<vmem>>, vector<1x1x8x129xf32>
    %316 = vector.shape_cast %315 : vector<1x1x8x129xf32> to vector<8x129xf32>
    %c0_195 = arith.constant 0 : index
    %c17_196 = arith.constant 17 : index
    %317 = memref.load %arg3[%c0_195, %c17_196] : memref<4x32xf32, #tpu.memory_space<smem>>
    %318 = vector.broadcast %317 : f32 to vector<8x129xf32>
    %319 = arith.mulf %318, %316 : vector<8x129xf32>
    %320 = arith.addf %302, %319 : vector<8x129xf32>
    %c1_197 = arith.constant 1 : index
    %c17_198 = arith.constant 17 : index
    %321 = memref.load %arg3[%c1_197, %c17_198] : memref<4x32xf32, #tpu.memory_space<smem>>
    %322 = vector.broadcast %321 : f32 to vector<8x129xf32>
    %323 = arith.mulf %322, %316 : vector<8x129xf32>
    %324 = arith.addf %306, %323 : vector<8x129xf32>
    %c2_199 = arith.constant 2 : index
    %c17_200 = arith.constant 17 : index
    %325 = memref.load %arg3[%c2_199, %c17_200] : memref<4x32xf32, #tpu.memory_space<smem>>
    %326 = vector.broadcast %325 : f32 to vector<8x129xf32>
    %327 = arith.mulf %326, %316 : vector<8x129xf32>
    %328 = arith.addf %310, %327 : vector<8x129xf32>
    %c3_201 = arith.constant 3 : index
    %c17_202 = arith.constant 17 : index
    %329 = memref.load %arg3[%c3_201, %c17_202] : memref<4x32xf32, #tpu.memory_space<smem>>
    %330 = vector.broadcast %329 : f32 to vector<8x129xf32>
    %331 = arith.mulf %330, %316 : vector<8x129xf32>
    %332 = arith.addf %314, %331 : vector<8x129xf32>
    %c0_203 = arith.constant 0 : index
    %c18 = arith.constant 18 : index
    %c0_204 = arith.constant 0 : index
    %c0_205 = arith.constant 0 : index
    %333 = vector.load %arg2[%c0_203, %c18, %c0_204, %c0_205] : memref<1x32x8x129xf32, #tpu.memory_space<vmem>>, vector<1x1x8x129xf32>
    %334 = vector.shape_cast %333 : vector<1x1x8x129xf32> to vector<8x129xf32>
    %c0_206 = arith.constant 0 : index
    %c18_207 = arith.constant 18 : index
    %335 = memref.load %arg3[%c0_206, %c18_207] : memref<4x32xf32, #tpu.memory_space<smem>>
    %336 = vector.broadcast %335 : f32 to vector<8x129xf32>
    %337 = arith.mulf %336, %334 : vector<8x129xf32>
    %338 = arith.addf %320, %337 : vector<8x129xf32>
    %c1_208 = arith.constant 1 : index
    %c18_209 = arith.constant 18 : index
    %339 = memref.load %arg3[%c1_208, %c18_209] : memref<4x32xf32, #tpu.memory_space<smem>>
    %340 = vector.broadcast %339 : f32 to vector<8x129xf32>
    %341 = arith.mulf %340, %334 : vector<8x129xf32>
    %342 = arith.addf %324, %341 : vector<8x129xf32>
    %c2_210 = arith.constant 2 : index
    %c18_211 = arith.constant 18 : index
    %343 = memref.load %arg3[%c2_210, %c18_211] : memref<4x32xf32, #tpu.memory_space<smem>>
    %344 = vector.broadcast %343 : f32 to vector<8x129xf32>
    %345 = arith.mulf %344, %334 : vector<8x129xf32>
    %346 = arith.addf %328, %345 : vector<8x129xf32>
    %c3_212 = arith.constant 3 : index
    %c18_213 = arith.constant 18 : index
    %347 = memref.load %arg3[%c3_212, %c18_213] : memref<4x32xf32, #tpu.memory_space<smem>>
    %348 = vector.broadcast %347 : f32 to vector<8x129xf32>
    %349 = arith.mulf %348, %334 : vector<8x129xf32>
    %350 = arith.addf %332, %349 : vector<8x129xf32>
    %c0_214 = arith.constant 0 : index
    %c19 = arith.constant 19 : index
    %c0_215 = arith.constant 0 : index
    %c0_216 = arith.constant 0 : index
    %351 = vector.load %arg2[%c0_214, %c19, %c0_215, %c0_216] : memref<1x32x8x129xf32, #tpu.memory_space<vmem>>, vector<1x1x8x129xf32>
    %352 = vector.shape_cast %351 : vector<1x1x8x129xf32> to vector<8x129xf32>
    %c0_217 = arith.constant 0 : index
    %c19_218 = arith.constant 19 : index
    %353 = memref.load %arg3[%c0_217, %c19_218] : memref<4x32xf32, #tpu.memory_space<smem>>
    %354 = vector.broadcast %353 : f32 to vector<8x129xf32>
    %355 = arith.mulf %354, %352 : vector<8x129xf32>
    %356 = arith.addf %338, %355 : vector<8x129xf32>
    %c1_219 = arith.constant 1 : index
    %c19_220 = arith.constant 19 : index
    %357 = memref.load %arg3[%c1_219, %c19_220] : memref<4x32xf32, #tpu.memory_space<smem>>
    %358 = vector.broadcast %357 : f32 to vector<8x129xf32>
    %359 = arith.mulf %358, %352 : vector<8x129xf32>
    %360 = arith.addf %342, %359 : vector<8x129xf32>
    %c2_221 = arith.constant 2 : index
    %c19_222 = arith.constant 19 : index
    %361 = memref.load %arg3[%c2_221, %c19_222] : memref<4x32xf32, #tpu.memory_space<smem>>
    %362 = vector.broadcast %361 : f32 to vector<8x129xf32>
    %363 = arith.mulf %362, %352 : vector<8x129xf32>
    %364 = arith.addf %346, %363 : vector<8x129xf32>
    %c3_223 = arith.constant 3 : index
    %c19_224 = arith.constant 19 : index
    %365 = memref.load %arg3[%c3_223, %c19_224] : memref<4x32xf32, #tpu.memory_space<smem>>
    %366 = vector.broadcast %365 : f32 to vector<8x129xf32>
    %367 = arith.mulf %366, %352 : vector<8x129xf32>
    %368 = arith.addf %350, %367 : vector<8x129xf32>
    %c0_225 = arith.constant 0 : index
    %c20 = arith.constant 20 : index
    %c0_226 = arith.constant 0 : index
    %c0_227 = arith.constant 0 : index
    %369 = vector.load %arg2[%c0_225, %c20, %c0_226, %c0_227] : memref<1x32x8x129xf32, #tpu.memory_space<vmem>>, vector<1x1x8x129xf32>
    %370 = vector.shape_cast %369 : vector<1x1x8x129xf32> to vector<8x129xf32>
    %c0_228 = arith.constant 0 : index
    %c20_229 = arith.constant 20 : index
    %371 = memref.load %arg3[%c0_228, %c20_229] : memref<4x32xf32, #tpu.memory_space<smem>>
    %372 = vector.broadcast %371 : f32 to vector<8x129xf32>
    %373 = arith.mulf %372, %370 : vector<8x129xf32>
    %374 = arith.addf %356, %373 : vector<8x129xf32>
    %c1_230 = arith.constant 1 : index
    %c20_231 = arith.constant 20 : index
    %375 = memref.load %arg3[%c1_230, %c20_231] : memref<4x32xf32, #tpu.memory_space<smem>>
    %376 = vector.broadcast %375 : f32 to vector<8x129xf32>
    %377 = arith.mulf %376, %370 : vector<8x129xf32>
    %378 = arith.addf %360, %377 : vector<8x129xf32>
    %c2_232 = arith.constant 2 : index
    %c20_233 = arith.constant 20 : index
    %379 = memref.load %arg3[%c2_232, %c20_233] : memref<4x32xf32, #tpu.memory_space<smem>>
    %380 = vector.broadcast %379 : f32 to vector<8x129xf32>
    %381 = arith.mulf %380, %370 : vector<8x129xf32>
    %382 = arith.addf %364, %381 : vector<8x129xf32>
    %c3_234 = arith.constant 3 : index
    %c20_235 = arith.constant 20 : index
    %383 = memref.load %arg3[%c3_234, %c20_235] : memref<4x32xf32, #tpu.memory_space<smem>>
    %384 = vector.broadcast %383 : f32 to vector<8x129xf32>
    %385 = arith.mulf %384, %370 : vector<8x129xf32>
    %386 = arith.addf %368, %385 : vector<8x129xf32>
    %c0_236 = arith.constant 0 : index
    %c21 = arith.constant 21 : index
    %c0_237 = arith.constant 0 : index
    %c0_238 = arith.constant 0 : index
    %387 = vector.load %arg2[%c0_236, %c21, %c0_237, %c0_238] : memref<1x32x8x129xf32, #tpu.memory_space<vmem>>, vector<1x1x8x129xf32>
    %388 = vector.shape_cast %387 : vector<1x1x8x129xf32> to vector<8x129xf32>
    %c0_239 = arith.constant 0 : index
    %c21_240 = arith.constant 21 : index
    %389 = memref.load %arg3[%c0_239, %c21_240] : memref<4x32xf32, #tpu.memory_space<smem>>
    %390 = vector.broadcast %389 : f32 to vector<8x129xf32>
    %391 = arith.mulf %390, %388 : vector<8x129xf32>
    %392 = arith.addf %374, %391 : vector<8x129xf32>
    %c1_241 = arith.constant 1 : index
    %c21_242 = arith.constant 21 : index
    %393 = memref.load %arg3[%c1_241, %c21_242] : memref<4x32xf32, #tpu.memory_space<smem>>
    %394 = vector.broadcast %393 : f32 to vector<8x129xf32>
    %395 = arith.mulf %394, %388 : vector<8x129xf32>
    %396 = arith.addf %378, %395 : vector<8x129xf32>
    %c2_243 = arith.constant 2 : index
    %c21_244 = arith.constant 21 : index
    %397 = memref.load %arg3[%c2_243, %c21_244] : memref<4x32xf32, #tpu.memory_space<smem>>
    %398 = vector.broadcast %397 : f32 to vector<8x129xf32>
    %399 = arith.mulf %398, %388 : vector<8x129xf32>
    %400 = arith.addf %382, %399 : vector<8x129xf32>
    %c3_245 = arith.constant 3 : index
    %c21_246 = arith.constant 21 : index
    %401 = memref.load %arg3[%c3_245, %c21_246] : memref<4x32xf32, #tpu.memory_space<smem>>
    %402 = vector.broadcast %401 : f32 to vector<8x129xf32>
    %403 = arith.mulf %402, %388 : vector<8x129xf32>
    %404 = arith.addf %386, %403 : vector<8x129xf32>
    %c0_247 = arith.constant 0 : index
    %c22 = arith.constant 22 : index
    %c0_248 = arith.constant 0 : index
    %c0_249 = arith.constant 0 : index
    %405 = vector.load %arg2[%c0_247, %c22, %c0_248, %c0_249] : memref<1x32x8x129xf32, #tpu.memory_space<vmem>>, vector<1x1x8x129xf32>
    %406 = vector.shape_cast %405 : vector<1x1x8x129xf32> to vector<8x129xf32>
    %c0_250 = arith.constant 0 : index
    %c22_251 = arith.constant 22 : index
    %407 = memref.load %arg3[%c0_250, %c22_251] : memref<4x32xf32, #tpu.memory_space<smem>>
    %408 = vector.broadcast %407 : f32 to vector<8x129xf32>
    %409 = arith.mulf %408, %406 : vector<8x129xf32>
    %410 = arith.addf %392, %409 : vector<8x129xf32>
    %c1_252 = arith.constant 1 : index
    %c22_253 = arith.constant 22 : index
    %411 = memref.load %arg3[%c1_252, %c22_253] : memref<4x32xf32, #tpu.memory_space<smem>>
    %412 = vector.broadcast %411 : f32 to vector<8x129xf32>
    %413 = arith.mulf %412, %406 : vector<8x129xf32>
    %414 = arith.addf %396, %413 : vector<8x129xf32>
    %c2_254 = arith.constant 2 : index
    %c22_255 = arith.constant 22 : index
    %415 = memref.load %arg3[%c2_254, %c22_255] : memref<4x32xf32, #tpu.memory_space<smem>>
    %416 = vector.broadcast %415 : f32 to vector<8x129xf32>
    %417 = arith.mulf %416, %406 : vector<8x129xf32>
    %418 = arith.addf %400, %417 : vector<8x129xf32>
    %c3_256 = arith.constant 3 : index
    %c22_257 = arith.constant 22 : index
    %419 = memref.load %arg3[%c3_256, %c22_257] : memref<4x32xf32, #tpu.memory_space<smem>>
    %420 = vector.broadcast %419 : f32 to vector<8x129xf32>
    %421 = arith.mulf %420, %406 : vector<8x129xf32>
    %422 = arith.addf %404, %421 : vector<8x129xf32>
    %c0_258 = arith.constant 0 : index
    %c23 = arith.constant 23 : index
    %c0_259 = arith.constant 0 : index
    %c0_260 = arith.constant 0 : index
    %423 = vector.load %arg2[%c0_258, %c23, %c0_259, %c0_260] : memref<1x32x8x129xf32, #tpu.memory_space<vmem>>, vector<1x1x8x129xf32>
    %424 = vector.shape_cast %423 : vector<1x1x8x129xf32> to vector<8x129xf32>
    %c0_261 = arith.constant 0 : index
    %c23_262 = arith.constant 23 : index
    %425 = memref.load %arg3[%c0_261, %c23_262] : memref<4x32xf32, #tpu.memory_space<smem>>
    %426 = vector.broadcast %425 : f32 to vector<8x129xf32>
    %427 = arith.mulf %426, %424 : vector<8x129xf32>
    %428 = arith.addf %410, %427 : vector<8x129xf32>
    %c1_263 = arith.constant 1 : index
    %c23_264 = arith.constant 23 : index
    %429 = memref.load %arg3[%c1_263, %c23_264] : memref<4x32xf32, #tpu.memory_space<smem>>
    %430 = vector.broadcast %429 : f32 to vector<8x129xf32>
    %431 = arith.mulf %430, %424 : vector<8x129xf32>
    %432 = arith.addf %414, %431 : vector<8x129xf32>
    %c2_265 = arith.constant 2 : index
    %c23_266 = arith.constant 23 : index
    %433 = memref.load %arg3[%c2_265, %c23_266] : memref<4x32xf32, #tpu.memory_space<smem>>
    %434 = vector.broadcast %433 : f32 to vector<8x129xf32>
    %435 = arith.mulf %434, %424 : vector<8x129xf32>
    %436 = arith.addf %418, %435 : vector<8x129xf32>
    %c3_267 = arith.constant 3 : index
    %c23_268 = arith.constant 23 : index
    %437 = memref.load %arg3[%c3_267, %c23_268] : memref<4x32xf32, #tpu.memory_space<smem>>
    %438 = vector.broadcast %437 : f32 to vector<8x129xf32>
    %439 = arith.mulf %438, %424 : vector<8x129xf32>
    %440 = arith.addf %422, %439 : vector<8x129xf32>
    %c0_269 = arith.constant 0 : index
    %c24 = arith.constant 24 : index
    %c0_270 = arith.constant 0 : index
    %c0_271 = arith.constant 0 : index
    %441 = vector.load %arg2[%c0_269, %c24, %c0_270, %c0_271] : memref<1x32x8x129xf32, #tpu.memory_space<vmem>>, vector<1x1x8x129xf32>
    %442 = vector.shape_cast %441 : vector<1x1x8x129xf32> to vector<8x129xf32>
    %c0_272 = arith.constant 0 : index
    %c24_273 = arith.constant 24 : index
    %443 = memref.load %arg3[%c0_272, %c24_273] : memref<4x32xf32, #tpu.memory_space<smem>>
    %444 = vector.broadcast %443 : f32 to vector<8x129xf32>
    %445 = arith.mulf %444, %442 : vector<8x129xf32>
    %446 = arith.addf %428, %445 : vector<8x129xf32>
    %c1_274 = arith.constant 1 : index
    %c24_275 = arith.constant 24 : index
    %447 = memref.load %arg3[%c1_274, %c24_275] : memref<4x32xf32, #tpu.memory_space<smem>>
    %448 = vector.broadcast %447 : f32 to vector<8x129xf32>
    %449 = arith.mulf %448, %442 : vector<8x129xf32>
    %450 = arith.addf %432, %449 : vector<8x129xf32>
    %c2_276 = arith.constant 2 : index
    %c24_277 = arith.constant 24 : index
    %451 = memref.load %arg3[%c2_276, %c24_277] : memref<4x32xf32, #tpu.memory_space<smem>>
    %452 = vector.broadcast %451 : f32 to vector<8x129xf32>
    %453 = arith.mulf %452, %442 : vector<8x129xf32>
    %454 = arith.addf %436, %453 : vector<8x129xf32>
    %c3_278 = arith.constant 3 : index
    %c24_279 = arith.constant 24 : index
    %455 = memref.load %arg3[%c3_278, %c24_279] : memref<4x32xf32, #tpu.memory_space<smem>>
    %456 = vector.broadcast %455 : f32 to vector<8x129xf32>
    %457 = arith.mulf %456, %442 : vector<8x129xf32>
    %458 = arith.addf %440, %457 : vector<8x129xf32>
    %c0_280 = arith.constant 0 : index
    %c25 = arith.constant 25 : index
    %c0_281 = arith.constant 0 : index
    %c0_282 = arith.constant 0 : index
    %459 = vector.load %arg2[%c0_280, %c25, %c0_281, %c0_282] : memref<1x32x8x129xf32, #tpu.memory_space<vmem>>, vector<1x1x8x129xf32>
    %460 = vector.shape_cast %459 : vector<1x1x8x129xf32> to vector<8x129xf32>
    %c0_283 = arith.constant 0 : index
    %c25_284 = arith.constant 25 : index
    %461 = memref.load %arg3[%c0_283, %c25_284] : memref<4x32xf32, #tpu.memory_space<smem>>
    %462 = vector.broadcast %461 : f32 to vector<8x129xf32>
    %463 = arith.mulf %462, %460 : vector<8x129xf32>
    %464 = arith.addf %446, %463 : vector<8x129xf32>
    %c1_285 = arith.constant 1 : index
    %c25_286 = arith.constant 25 : index
    %465 = memref.load %arg3[%c1_285, %c25_286] : memref<4x32xf32, #tpu.memory_space<smem>>
    %466 = vector.broadcast %465 : f32 to vector<8x129xf32>
    %467 = arith.mulf %466, %460 : vector<8x129xf32>
    %468 = arith.addf %450, %467 : vector<8x129xf32>
    %c2_287 = arith.constant 2 : index
    %c25_288 = arith.constant 25 : index
    %469 = memref.load %arg3[%c2_287, %c25_288] : memref<4x32xf32, #tpu.memory_space<smem>>
    %470 = vector.broadcast %469 : f32 to vector<8x129xf32>
    %471 = arith.mulf %470, %460 : vector<8x129xf32>
    %472 = arith.addf %454, %471 : vector<8x129xf32>
    %c3_289 = arith.constant 3 : index
    %c25_290 = arith.constant 25 : index
    %473 = memref.load %arg3[%c3_289, %c25_290] : memref<4x32xf32, #tpu.memory_space<smem>>
    %474 = vector.broadcast %473 : f32 to vector<8x129xf32>
    %475 = arith.mulf %474, %460 : vector<8x129xf32>
    %476 = arith.addf %458, %475 : vector<8x129xf32>
    %c0_291 = arith.constant 0 : index
    %c26 = arith.constant 26 : index
    %c0_292 = arith.constant 0 : index
    %c0_293 = arith.constant 0 : index
    %477 = vector.load %arg2[%c0_291, %c26, %c0_292, %c0_293] : memref<1x32x8x129xf32, #tpu.memory_space<vmem>>, vector<1x1x8x129xf32>
    %478 = vector.shape_cast %477 : vector<1x1x8x129xf32> to vector<8x129xf32>
    %c0_294 = arith.constant 0 : index
    %c26_295 = arith.constant 26 : index
    %479 = memref.load %arg3[%c0_294, %c26_295] : memref<4x32xf32, #tpu.memory_space<smem>>
    %480 = vector.broadcast %479 : f32 to vector<8x129xf32>
    %481 = arith.mulf %480, %478 : vector<8x129xf32>
    %482 = arith.addf %464, %481 : vector<8x129xf32>
    %c1_296 = arith.constant 1 : index
    %c26_297 = arith.constant 26 : index
    %483 = memref.load %arg3[%c1_296, %c26_297] : memref<4x32xf32, #tpu.memory_space<smem>>
    %484 = vector.broadcast %483 : f32 to vector<8x129xf32>
    %485 = arith.mulf %484, %478 : vector<8x129xf32>
    %486 = arith.addf %468, %485 : vector<8x129xf32>
    %c2_298 = arith.constant 2 : index
    %c26_299 = arith.constant 26 : index
    %487 = memref.load %arg3[%c2_298, %c26_299] : memref<4x32xf32, #tpu.memory_space<smem>>
    %488 = vector.broadcast %487 : f32 to vector<8x129xf32>
    %489 = arith.mulf %488, %478 : vector<8x129xf32>
    %490 = arith.addf %472, %489 : vector<8x129xf32>
    %c3_300 = arith.constant 3 : index
    %c26_301 = arith.constant 26 : index
    %491 = memref.load %arg3[%c3_300, %c26_301] : memref<4x32xf32, #tpu.memory_space<smem>>
    %492 = vector.broadcast %491 : f32 to vector<8x129xf32>
    %493 = arith.mulf %492, %478 : vector<8x129xf32>
    %494 = arith.addf %476, %493 : vector<8x129xf32>
    %c0_302 = arith.constant 0 : index
    %c27 = arith.constant 27 : index
    %c0_303 = arith.constant 0 : index
    %c0_304 = arith.constant 0 : index
    %495 = vector.load %arg2[%c0_302, %c27, %c0_303, %c0_304] : memref<1x32x8x129xf32, #tpu.memory_space<vmem>>, vector<1x1x8x129xf32>
    %496 = vector.shape_cast %495 : vector<1x1x8x129xf32> to vector<8x129xf32>
    %c0_305 = arith.constant 0 : index
    %c27_306 = arith.constant 27 : index
    %497 = memref.load %arg3[%c0_305, %c27_306] : memref<4x32xf32, #tpu.memory_space<smem>>
    %498 = vector.broadcast %497 : f32 to vector<8x129xf32>
    %499 = arith.mulf %498, %496 : vector<8x129xf32>
    %500 = arith.addf %482, %499 : vector<8x129xf32>
    %c1_307 = arith.constant 1 : index
    %c27_308 = arith.constant 27 : index
    %501 = memref.load %arg3[%c1_307, %c27_308] : memref<4x32xf32, #tpu.memory_space<smem>>
    %502 = vector.broadcast %501 : f32 to vector<8x129xf32>
    %503 = arith.mulf %502, %496 : vector<8x129xf32>
    %504 = arith.addf %486, %503 : vector<8x129xf32>
    %c2_309 = arith.constant 2 : index
    %c27_310 = arith.constant 27 : index
    %505 = memref.load %arg3[%c2_309, %c27_310] : memref<4x32xf32, #tpu.memory_space<smem>>
    %506 = vector.broadcast %505 : f32 to vector<8x129xf32>
    %507 = arith.mulf %506, %496 : vector<8x129xf32>
    %508 = arith.addf %490, %507 : vector<8x129xf32>
    %c3_311 = arith.constant 3 : index
    %c27_312 = arith.constant 27 : index
    %509 = memref.load %arg3[%c3_311, %c27_312] : memref<4x32xf32, #tpu.memory_space<smem>>
    %510 = vector.broadcast %509 : f32 to vector<8x129xf32>
    %511 = arith.mulf %510, %496 : vector<8x129xf32>
    %512 = arith.addf %494, %511 : vector<8x129xf32>
    %c0_313 = arith.constant 0 : index
    %c28 = arith.constant 28 : index
    %c0_314 = arith.constant 0 : index
    %c0_315 = arith.constant 0 : index
    %513 = vector.load %arg2[%c0_313, %c28, %c0_314, %c0_315] : memref<1x32x8x129xf32, #tpu.memory_space<vmem>>, vector<1x1x8x129xf32>
    %514 = vector.shape_cast %513 : vector<1x1x8x129xf32> to vector<8x129xf32>
    %c0_316 = arith.constant 0 : index
    %c28_317 = arith.constant 28 : index
    %515 = memref.load %arg3[%c0_316, %c28_317] : memref<4x32xf32, #tpu.memory_space<smem>>
    %516 = vector.broadcast %515 : f32 to vector<8x129xf32>
    %517 = arith.mulf %516, %514 : vector<8x129xf32>
    %518 = arith.addf %500, %517 : vector<8x129xf32>
    %c1_318 = arith.constant 1 : index
    %c28_319 = arith.constant 28 : index
    %519 = memref.load %arg3[%c1_318, %c28_319] : memref<4x32xf32, #tpu.memory_space<smem>>
    %520 = vector.broadcast %519 : f32 to vector<8x129xf32>
    %521 = arith.mulf %520, %514 : vector<8x129xf32>
    %522 = arith.addf %504, %521 : vector<8x129xf32>
    %c2_320 = arith.constant 2 : index
    %c28_321 = arith.constant 28 : index
    %523 = memref.load %arg3[%c2_320, %c28_321] : memref<4x32xf32, #tpu.memory_space<smem>>
    %524 = vector.broadcast %523 : f32 to vector<8x129xf32>
    %525 = arith.mulf %524, %514 : vector<8x129xf32>
    %526 = arith.addf %508, %525 : vector<8x129xf32>
    %c3_322 = arith.constant 3 : index
    %c28_323 = arith.constant 28 : index
    %527 = memref.load %arg3[%c3_322, %c28_323] : memref<4x32xf32, #tpu.memory_space<smem>>
    %528 = vector.broadcast %527 : f32 to vector<8x129xf32>
    %529 = arith.mulf %528, %514 : vector<8x129xf32>
    %530 = arith.addf %512, %529 : vector<8x129xf32>
    %c0_324 = arith.constant 0 : index
    %c29 = arith.constant 29 : index
    %c0_325 = arith.constant 0 : index
    %c0_326 = arith.constant 0 : index
    %531 = vector.load %arg2[%c0_324, %c29, %c0_325, %c0_326] : memref<1x32x8x129xf32, #tpu.memory_space<vmem>>, vector<1x1x8x129xf32>
    %532 = vector.shape_cast %531 : vector<1x1x8x129xf32> to vector<8x129xf32>
    %c0_327 = arith.constant 0 : index
    %c29_328 = arith.constant 29 : index
    %533 = memref.load %arg3[%c0_327, %c29_328] : memref<4x32xf32, #tpu.memory_space<smem>>
    %534 = vector.broadcast %533 : f32 to vector<8x129xf32>
    %535 = arith.mulf %534, %532 : vector<8x129xf32>
    %536 = arith.addf %518, %535 : vector<8x129xf32>
    %c1_329 = arith.constant 1 : index
    %c29_330 = arith.constant 29 : index
    %537 = memref.load %arg3[%c1_329, %c29_330] : memref<4x32xf32, #tpu.memory_space<smem>>
    %538 = vector.broadcast %537 : f32 to vector<8x129xf32>
    %539 = arith.mulf %538, %532 : vector<8x129xf32>
    %540 = arith.addf %522, %539 : vector<8x129xf32>
    %c2_331 = arith.constant 2 : index
    %c29_332 = arith.constant 29 : index
    %541 = memref.load %arg3[%c2_331, %c29_332] : memref<4x32xf32, #tpu.memory_space<smem>>
    %542 = vector.broadcast %541 : f32 to vector<8x129xf32>
    %543 = arith.mulf %542, %532 : vector<8x129xf32>
    %544 = arith.addf %526, %543 : vector<8x129xf32>
    %c3_333 = arith.constant 3 : index
    %c29_334 = arith.constant 29 : index
    %545 = memref.load %arg3[%c3_333, %c29_334] : memref<4x32xf32, #tpu.memory_space<smem>>
    %546 = vector.broadcast %545 : f32 to vector<8x129xf32>
    %547 = arith.mulf %546, %532 : vector<8x129xf32>
    %548 = arith.addf %530, %547 : vector<8x129xf32>
    %c0_335 = arith.constant 0 : index
    %c30 = arith.constant 30 : index
    %c0_336 = arith.constant 0 : index
    %c0_337 = arith.constant 0 : index
    %549 = vector.load %arg2[%c0_335, %c30, %c0_336, %c0_337] : memref<1x32x8x129xf32, #tpu.memory_space<vmem>>, vector<1x1x8x129xf32>
    %550 = vector.shape_cast %549 : vector<1x1x8x129xf32> to vector<8x129xf32>
    %c0_338 = arith.constant 0 : index
    %c30_339 = arith.constant 30 : index
    %551 = memref.load %arg3[%c0_338, %c30_339] : memref<4x32xf32, #tpu.memory_space<smem>>
    %552 = vector.broadcast %551 : f32 to vector<8x129xf32>
    %553 = arith.mulf %552, %550 : vector<8x129xf32>
    %554 = arith.addf %536, %553 : vector<8x129xf32>
    %c1_340 = arith.constant 1 : index
    %c30_341 = arith.constant 30 : index
    %555 = memref.load %arg3[%c1_340, %c30_341] : memref<4x32xf32, #tpu.memory_space<smem>>
    %556 = vector.broadcast %555 : f32 to vector<8x129xf32>
    %557 = arith.mulf %556, %550 : vector<8x129xf32>
    %558 = arith.addf %540, %557 : vector<8x129xf32>
    %c2_342 = arith.constant 2 : index
    %c30_343 = arith.constant 30 : index
    %559 = memref.load %arg3[%c2_342, %c30_343] : memref<4x32xf32, #tpu.memory_space<smem>>
    %560 = vector.broadcast %559 : f32 to vector<8x129xf32>
    %561 = arith.mulf %560, %550 : vector<8x129xf32>
    %562 = arith.addf %544, %561 : vector<8x129xf32>
    %c3_344 = arith.constant 3 : index
    %c30_345 = arith.constant 30 : index
    %563 = memref.load %arg3[%c3_344, %c30_345] : memref<4x32xf32, #tpu.memory_space<smem>>
    %564 = vector.broadcast %563 : f32 to vector<8x129xf32>
    %565 = arith.mulf %564, %550 : vector<8x129xf32>
    %566 = arith.addf %548, %565 : vector<8x129xf32>
    %c0_346 = arith.constant 0 : index
    %c31 = arith.constant 31 : index
    %c0_347 = arith.constant 0 : index
    %c0_348 = arith.constant 0 : index
    %567 = vector.load %arg2[%c0_346, %c31, %c0_347, %c0_348] : memref<1x32x8x129xf32, #tpu.memory_space<vmem>>, vector<1x1x8x129xf32>
    %568 = vector.shape_cast %567 : vector<1x1x8x129xf32> to vector<8x129xf32>
    %c0_349 = arith.constant 0 : index
    %c31_350 = arith.constant 31 : index
    %569 = memref.load %arg3[%c0_349, %c31_350] : memref<4x32xf32, #tpu.memory_space<smem>>
    %570 = vector.broadcast %569 : f32 to vector<8x129xf32>
    %571 = arith.mulf %570, %568 : vector<8x129xf32>
    %572 = arith.addf %554, %571 : vector<8x129xf32>
    %c1_351 = arith.constant 1 : index
    %c31_352 = arith.constant 31 : index
    %573 = memref.load %arg3[%c1_351, %c31_352] : memref<4x32xf32, #tpu.memory_space<smem>>
    %574 = vector.broadcast %573 : f32 to vector<8x129xf32>
    %575 = arith.mulf %574, %568 : vector<8x129xf32>
    %576 = arith.addf %558, %575 : vector<8x129xf32>
    %c2_353 = arith.constant 2 : index
    %c31_354 = arith.constant 31 : index
    %577 = memref.load %arg3[%c2_353, %c31_354] : memref<4x32xf32, #tpu.memory_space<smem>>
    %578 = vector.broadcast %577 : f32 to vector<8x129xf32>
    %579 = arith.mulf %578, %568 : vector<8x129xf32>
    %580 = arith.addf %562, %579 : vector<8x129xf32>
    %c3_355 = arith.constant 3 : index
    %c31_356 = arith.constant 31 : index
    %581 = memref.load %arg3[%c3_355, %c31_356] : memref<4x32xf32, #tpu.memory_space<smem>>
    %582 = vector.broadcast %581 : f32 to vector<8x129xf32>
    %583 = arith.mulf %582, %568 : vector<8x129xf32>
    %584 = arith.addf %566, %583 : vector<8x129xf32>
    %cst = arith.constant 0.000000e+00 : f32
    %585 = vector.broadcast %cst : f32 to vector<8x129xf32>
    %586 = arith.cmpf oge, %572, %585 : vector<8x129xf32>
    %587 = vector.broadcast %0 : f32 to vector<8x129xf32>
    %588 = arith.mulf %587, %572 : vector<8x129xf32>
    %589 = arith.select %586, %572, %588 : vector<8x129xi1>, vector<8x129xf32>
    %cst_357 = arith.constant 0.000000e+00 : f32
    %590 = vector.broadcast %cst_357 : f32 to vector<8x129xf32>
    %591 = arith.cmpf oge, %576, %590 : vector<8x129xf32>
    %592 = vector.broadcast %0 : f32 to vector<8x129xf32>
    %593 = arith.mulf %592, %576 : vector<8x129xf32>
    %594 = arith.select %591, %576, %593 : vector<8x129xi1>, vector<8x129xf32>
    %cst_358 = arith.constant 0.000000e+00 : f32
    %595 = vector.broadcast %cst_358 : f32 to vector<8x129xf32>
    %596 = arith.cmpf oge, %580, %595 : vector<8x129xf32>
    %597 = vector.broadcast %0 : f32 to vector<8x129xf32>
    %598 = arith.mulf %597, %580 : vector<8x129xf32>
    %599 = arith.select %596, %580, %598 : vector<8x129xi1>, vector<8x129xf32>
    %cst_359 = arith.constant 0.000000e+00 : f32
    %600 = vector.broadcast %cst_359 : f32 to vector<8x129xf32>
    %601 = arith.cmpf oge, %584, %600 : vector<8x129xf32>
    %602 = vector.broadcast %0 : f32 to vector<8x129xf32>
    %603 = arith.mulf %602, %584 : vector<8x129xf32>
    %604 = arith.select %601, %584, %603 : vector<8x129xi1>, vector<8x129xf32>
    %605 = arith.mulf %589, %589 : vector<8x129xf32>
    %606 = arith.addf %589, %594 : vector<8x129xf32>
    %607 = arith.mulf %594, %594 : vector<8x129xf32>
    %608 = arith.addf %605, %607 : vector<8x129xf32>
    %609 = arith.addf %606, %599 : vector<8x129xf32>
    %610 = arith.mulf %599, %599 : vector<8x129xf32>
    %611 = arith.addf %608, %610 : vector<8x129xf32>
    %612 = arith.addf %609, %604 : vector<8x129xf32>
    %613 = arith.mulf %604, %604 : vector<8x129xf32>
    %614 = arith.addf %611, %613 : vector<8x129xf32>
    %cst_360 = arith.constant dense<0.000000e+00> : vector<8xf32>
    %615 = vector.multi_reduction <add>, %612, %cst_360 [1] : vector<8x129xf32> to vector<8xf32>
    %616 = vector.shape_cast %615 : vector<8xf32> to vector<8x1xf32>
    %cst_361 = arith.constant dense<0.000000e+00> : vector<8xf32>
    %617 = vector.multi_reduction <add>, %614, %cst_361 [1] : vector<8x129xf32> to vector<8xf32>
    %618 = vector.shape_cast %617 : vector<8xf32> to vector<8x1xf32>
    %cst_362 = arith.constant 0.00193798449 : f32
    %619 = vector.broadcast %cst_362 : f32 to vector<8x1xf32>
    %620 = arith.mulf %616, %619 : vector<8x1xf32>
    %cst_363 = arith.constant 0.00193798449 : f32
    %621 = vector.broadcast %cst_363 : f32 to vector<8x1xf32>
    %622 = arith.mulf %618, %621 : vector<8x1xf32>
    %623 = arith.mulf %620, %620 : vector<8x1xf32>
    %624 = arith.subf %622, %623 : vector<8x1xf32>
    %cst_364 = arith.constant 0.000000e+00 : f32
    %625 = vector.broadcast %cst_364 : f32 to vector<8x1xf32>
    %626 = arith.maximumf %624, %625 : vector<8x1xf32>
    %cst_365 = arith.constant 9.99999974E-6 : f32
    %627 = vector.broadcast %cst_365 : f32 to vector<8x1xf32>
    %628 = arith.addf %626, %627 : vector<8x1xf32>
    %629 = math.rsqrt %628 : vector<8x1xf32>
    %c0_366 = arith.constant 0 : index
    %c0_367 = arith.constant 0 : index
    %630 = vector.load %arg6[%c0_366, %c0_367] : memref<4x129xf32, #tpu.memory_space<vmem>>, vector<1x129xf32>
    %c0_368 = arith.constant 0 : index
    %c0_369 = arith.constant 0 : index
    %631 = vector.load %arg7[%c0_368, %c0_369] : memref<4x129xf32, #tpu.memory_space<vmem>>, vector<1x129xf32>
    %632 = vector.broadcast %620 : vector<8x1xf32> to vector<8x129xf32>
    %633 = arith.subf %589, %632 : vector<8x129xf32>
    %634 = vector.broadcast %629 : vector<8x1xf32> to vector<8x129xf32>
    %635 = arith.mulf %633, %634 : vector<8x129xf32>
    %636 = vector.broadcast %630 : vector<1x129xf32> to vector<8x129xf32>
    %637 = arith.mulf %635, %636 : vector<8x129xf32>
    %638 = vector.broadcast %631 : vector<1x129xf32> to vector<8x129xf32>
    %639 = arith.addf %637, %638 : vector<8x129xf32>
    %c0_370 = arith.constant 0 : index
    %c0_371 = arith.constant 0 : index
    %c0_372 = arith.constant 0 : index
    %c0_373 = arith.constant 0 : index
    %640 = vector.load %arg8[%c0_370, %c0_371, %c0_372, %c0_373] : memref<1x4x8x129xf32, #tpu.memory_space<vmem>>, vector<1x1x8x129xf32>
    %641 = vector.shape_cast %640 : vector<1x1x8x129xf32> to vector<8x129xf32>
    %642 = vector.shape_cast %639 : vector<8x129xf32> to vector<1x1x8x129xf32>
    tpu.vector_store %arg8[%c0_370, %c0_371, %c0_372, %c0_373], %642 {strides = array<i32>} : memref<1x4x8x129xf32, #tpu.memory_space<vmem>>, vector<1x1x8x129xf32>,
    %c1_374 = arith.constant 1 : index
    %c0_375 = arith.constant 0 : index
    %643 = vector.load %arg6[%c1_374, %c0_375] : memref<4x129xf32, #tpu.memory_space<vmem>>, vector<1x129xf32>
    %c1_376 = arith.constant 1 : index
    %c0_377 = arith.constant 0 : index
    %644 = vector.load %arg7[%c1_376, %c0_377] : memref<4x129xf32, #tpu.memory_space<vmem>>, vector<1x129xf32>
    %645 = vector.broadcast %620 : vector<8x1xf32> to vector<8x129xf32>
    %646 = arith.subf %594, %645 : vector<8x129xf32>
    %647 = vector.broadcast %629 : vector<8x1xf32> to vector<8x129xf32>
    %648 = arith.mulf %646, %647 : vector<8x129xf32>
    %649 = vector.broadcast %643 : vector<1x129xf32> to vector<8x129xf32>
    %650 = arith.mulf %648, %649 : vector<8x129xf32>
    %651 = vector.broadcast %644 : vector<1x129xf32> to vector<8x129xf32>
    %652 = arith.addf %650, %651 : vector<8x129xf32>
    %c0_378 = arith.constant 0 : index
    %c1_379 = arith.constant 1 : index
    %c0_380 = arith.constant 0 : index
    %c0_381 = arith.constant 0 : index
    %653 = vector.load %arg8[%c0_378, %c1_379, %c0_380, %c0_381] : memref<1x4x8x129xf32, #tpu.memory_space<vmem>>, vector<1x1x8x129xf32>
    %654 = vector.shape_cast %653 : vector<1x1x8x129xf32> to vector<8x129xf32>
    %655 = vector.shape_cast %652 : vector<8x129xf32> to vector<1x1x8x129xf32>
    tpu.vector_store %arg8[%c0_378, %c1_379, %c0_380, %c0_381], %655 {strides = array<i32>} : memref<1x4x8x129xf32, #tpu.memory_space<vmem>>, vector<1x1x8x129xf32>,
    %c2_382 = arith.constant 2 : index
    %c0_383 = arith.constant 0 : index
    %656 = vector.load %arg6[%c2_382, %c0_383] : memref<4x129xf32, #tpu.memory_space<vmem>>, vector<1x129xf32>
    %c2_384 = arith.constant 2 : index
    %c0_385 = arith.constant 0 : index
    %657 = vector.load %arg7[%c2_384, %c0_385] : memref<4x129xf32, #tpu.memory_space<vmem>>, vector<1x129xf32>
    %658 = vector.broadcast %620 : vector<8x1xf32> to vector<8x129xf32>
    %659 = arith.subf %599, %658 : vector<8x129xf32>
    %660 = vector.broadcast %629 : vector<8x1xf32> to vector<8x129xf32>
    %661 = arith.mulf %659, %660 : vector<8x129xf32>
    %662 = vector.broadcast %656 : vector<1x129xf32> to vector<8x129xf32>
    %663 = arith.mulf %661, %662 : vector<8x129xf32>
    %664 = vector.broadcast %657 : vector<1x129xf32> to vector<8x129xf32>
    %665 = arith.addf %663, %664 : vector<8x129xf32>
    %c0_386 = arith.constant 0 : index
    %c2_387 = arith.constant 2 : index
    %c0_388 = arith.constant 0 : index
    %c0_389 = arith.constant 0 : index
    %666 = vector.load %arg8[%c0_386, %c2_387, %c0_388, %c0_389] : memref<1x4x8x129xf32, #tpu.memory_space<vmem>>, vector<1x1x8x129xf32>
    %667 = vector.shape_cast %666 : vector<1x1x8x129xf32> to vector<8x129xf32>
    %668 = vector.shape_cast %665 : vector<8x129xf32> to vector<1x1x8x129xf32>
    tpu.vector_store %arg8[%c0_386, %c2_387, %c0_388, %c0_389], %668 {strides = array<i32>} : memref<1x4x8x129xf32, #tpu.memory_space<vmem>>, vector<1x1x8x129xf32>,
    %c3_390 = arith.constant 3 : index
    %c0_391 = arith.constant 0 : index
    %669 = vector.load %arg6[%c3_390, %c0_391] : memref<4x129xf32, #tpu.memory_space<vmem>>, vector<1x129xf32>
    %c3_392 = arith.constant 3 : index
    %c0_393 = arith.constant 0 : index
    %670 = vector.load %arg7[%c3_392, %c0_393] : memref<4x129xf32, #tpu.memory_space<vmem>>, vector<1x129xf32>
    %671 = vector.broadcast %620 : vector<8x1xf32> to vector<8x129xf32>
    %672 = arith.subf %604, %671 : vector<8x129xf32>
    %673 = vector.broadcast %629 : vector<8x1xf32> to vector<8x129xf32>
    %674 = arith.mulf %672, %673 : vector<8x129xf32>
    %675 = vector.broadcast %669 : vector<1x129xf32> to vector<8x129xf32>
    %676 = arith.mulf %674, %675 : vector<8x129xf32>
    %677 = vector.broadcast %670 : vector<1x129xf32> to vector<8x129xf32>
    %678 = arith.addf %676, %677 : vector<8x129xf32>
    %c0_394 = arith.constant 0 : index
    %c3_395 = arith.constant 3 : index
    %c0_396 = arith.constant 0 : index
    %c0_397 = arith.constant 0 : index
    %679 = vector.load %arg8[%c0_394, %c3_395, %c0_396, %c0_397] : memref<1x4x8x129xf32, #tpu.memory_space<vmem>>, vector<1x1x8x129xf32>
    %680 = vector.shape_cast %679 : vector<1x1x8x129xf32> to vector<8x129xf32>
    %681 = vector.shape_cast %678 : vector<8x129xf32> to vector<1x1x8x129xf32>
    tpu.vector_store %arg8[%c0_394, %c3_395, %c0_396, %c0_397], %681 {strides = array<i32>} : memref<1x4x8x129xf32, #tpu.memory_space<vmem>>, vector<1x1x8x129xf32>,
    return
  }
  func.func @transform_0(%arg0: i32, %arg1: i32) -> (i32, i32, i32, i32) {
    %c0_i32 = arith.constant 0 : i32
    %c0_i32_0 = arith.constant 0 : i32
    %c0_i32_1 = arith.constant 0 : i32
    return %arg0, %c0_i32, %arg1, %c0_i32_0 : i32, i32, i32, i32
  }
  func.func @transform_1(%arg0: i32, %arg1: i32) -> (i32, i32) {
    %c0_i32 = arith.constant 0 : i32
    %c0_i32_0 = arith.constant 0 : i32
    %c0_i32_1 = arith.constant 0 : i32
    return %c0_i32, %c0_i32_0 : i32, i32
  }
  func.func @transform_2(%arg0: i32, %arg1: i32) -> i32 {
    %c0_i32 = arith.constant 0 : i32
    %c0_i32_0 = arith.constant 0 : i32
    return %c0_i32 : i32
  }
  func.func @transform_3(%arg0: i32, %arg1: i32) -> i32 {
    %c0_i32 = arith.constant 0 : i32
    %c0_i32_0 = arith.constant 0 : i32
    return %c0_i32 : i32
  }
  func.func @transform_4(%arg0: i32, %arg1: i32) -> (i32, i32) {
    %c0_i32 = arith.constant 0 : i32
    %c0_i32_0 = arith.constant 0 : i32
    %c0_i32_1 = arith.constant 0 : i32
    return %c0_i32, %c0_i32_0 : i32, i32
  }
  func.func @transform_5(%arg0: i32, %arg1: i32) -> (i32, i32) {
    %c0_i32 = arith.constant 0 : i32
    %c0_i32_0 = arith.constant 0 : i32
    %c0_i32_1 = arith.constant 0 : i32
    return %c0_i32, %c0_i32_0 : i32, i32
  }
  func.func @transform_6(%arg0: i32, %arg1: i32) -> (i32, i32, i32, i32) {
    %c0_i32 = arith.constant 0 : i32
    %c0_i32_0 = arith.constant 0 : i32
    %c0_i32_1 = arith.constant 0 : i32
    return %arg0, %c0_i32, %arg1, %c0_i32_0 : i32, i32, i32, i32
  }
}

</mosaic_0001>

<llo_original>
// kernel: tpu_custom_call.1
$region0: #{tpu_custom_call.1}
  #allocation0 [shape = 'u32[]', space=smem, size = 0x4, offset = 0x4, fixed_abs, tag = 'smem constant byte address 0x4 - core index']
  #allocation1 [shape = 'u32[144,128]{1,0:T(1,128)}', space=vmem, size = 0x12000, scoped, tag = 'internal scratch']
  #allocation2 [shape = 'f32[1]{0:T(128)S(6)}', space=smem, size = 0x200, scoped, tag = 'scoped memory for tpu_custom_call.1']
  %s0 = inlined_call_operand.hbm [shape: f32[2,32,8,129], index: 0, kind: input, shape index: {}]
  %s1 = inlined_call_operand.hbm [shape: f32[4,32], index: 1, kind: input, shape index: {}]
  %s2 = inlined_call_operand.vmem [shape: f32[4], index: 2, kind: input, shape index: {}]
  %s3 = inlined_call_operand.<no memory space> [shape: f32[1], index: 3, kind: input, shape index: {}]
  %s4 = inlined_call_operand.vmem [shape: f32[4,129], index: 4, kind: input, shape index: {}]
  %s5 = inlined_call_operand.vmem [shape: f32[4,129], index: 5, kind: input, shape index: {}]
  %s6 = inlined_call_operand.hbm [shape: f32[2,4,8,129], index: 6, kind: output, shape index: {}]
  %s7 = sld [smem:[#allocation0]]
  $region69: #{tpu_custom_call.1} parent=0
    _
  %s9 = ssub.s32 1, %s7
  %s10 = scalar_select 0, %s9, %s7
  %11 = sst [smem:[#allocation2]] %s3
  $region1: #{tpu_custom_call.1} parent=0
    #allocation3 [shape = 'u8[524288]{0}', space=vmem, size = 0x80000, scoped, tag = 'input window, operand 0']
    #allocation4 [shape = 's32[2]{0}', space=sflag, size = 0x8, scoped, tag = 'scoped memory for tpu_custom_call.1']
    #allocation5 [shape = 's32[2]{0}', space=sflag, size = 0x8, scoped, tag = 'scoped memory for tpu_custom_call.1']
    #allocation6 [shape = 's32[2]{0}', space=sflag, size = 0x8, scoped, tag = 'scoped memory for tpu_custom_call.1']
    #allocation7 [shape = 's32[2]{0}', space=sflag, size = 0x8, scoped, tag = 'scoped memory for tpu_custom_call.1']
    #allocation8 [shape = 'u8[2048]{0}', space=smem, size = 0x800, scoped, tag = 'input window, operand 1, single buffered']
    #allocation9 [shape = 'u8[512]{0}', space=smem, size = 0x200, scoped, tag = 'input window, operand 2, single buffered']
    #allocation10 [shape = 'u8[65536]{0}', space=vmem, size = 0x10000, scoped, tag = 'output window, operand 0']
    %12 = vsyncpa [#allocation4], 0
    %s13 = scalar_lea.sflag [#allocation4], 1
    %14 = vsyncpa %s13, 0
    %15 = vsyncpa [#allocation6], 0
    %16 = vsyncpa [#allocation7], 0
    %17 = vsyncpa [#allocation5], 0
    %s18 = scalar_lea.sflag [#allocation5], 1
    %19 = vsyncpa %s18, 0
    loop: start=0, step=1, limit=4
    $region2: #{tpu_custom_call.1} parent=1 // loop_pre_header
      _
    $region3: #{tpu_custom_call.1} parent=1 // loop_header
      %s21 = sphi 0, %s25
      %p22 = scmp.ge.s32.totalorder %s21, 4
      %s28 = sphi 0, %s40
      %s29 = sphi 0, %s36
      %s30 = sphi 0, %s28
      %s31 = sphi 0, %s29
      %s32 = sphi 0, %s30
      %s33 = sphi 0, %s31
      %s45 = sphi 0, %s47
      %s48 = sphi 0, %s45
      %s49 = sphi 0, %s48
      %s65 = sphi 0, %s49
      %s69 = sphi 0, %s69
      %s71 = sphi 0, %s69
      %s72 = sphi 0, %s71
      %s86 = sphi 0, %s72
      %s90 = sphi 0, %s90
      %s92 = sphi 0, %s90
      %s93 = sphi 0, %s92
      %s107 = sphi 0, %s93
      %s111 = sphi 0, %s111
      %s113 = sphi 0, %s111
      %s114 = sphi 0, %s113
      %s128 = sphi 0, %s114
      %s132 = sphi 0, %s132
      %s134 = sphi 0, %s132
      %s135 = sphi 0, %s134
      %s149 = sphi 0, %s135
      %s153 = sphi 0, %s153
      %s155 = sphi 0, %s153
      %s156 = sphi 0, %s155
      %s170 = sphi 0, %s156
      %s178 = sphi 0, %s180
      %s181 = sphi 0, %s178
      %s182 = sphi 0, %s181
      %s198 = sphi 0, %s182
    $region4: #{tpu_custom_call.1} parent=1 // loop_header_branch
      %24 = sbr.rel (%p22) target = $region8
    $region5: #{tpu_custom_call.1} parent=1 // loop_body
      %s26 = ssub.s32 %s21, 1
      %s27 = ssub.s32 %s21, 2
      %s34 = sadd.s32 1, %s29
      %p35 = scmp.ge.s32.totalorder %s34, 1
      %s36 = scalar_select %p35, 0, %s34
      %s37 = sadd.s32 1, %s28
      %s38 = scalar_select %p35, %s37, %s28
      %p39 = scmp.ge.s32.totalorder %s38, 2
      %s40 = scalar_select %p39, 0, %s38
      %s41 = ssub.s32 %s28, %s40
      %s42 = ssub.s32 %s29, %s36
      %s43 = sor.u32 %s41, %s42
      %p44 = scmp.eq.s32.totalorder %s43, 0
      %s46 = sadd.s32 %s45, 1
      %s47 = scalar_select %p44, %s45, %s46
      %p50 = pneg %p44
      %p51 = scmp.eq.s32.totalorder %s21, 1
      %p52 = por %p50, %p51
      %p53 = scmp.ne.s32.totalorder %s45, %s48
      %p54 = scmp.eq.s32.totalorder %s21, 0
      %p55 = por %p53, %p54
      %p56 = scmp.ne.s32.totalorder %s45, %s48
      %p57 = scmp.eq.s32.totalorder %s26, 1
      %p58 = por %p56, %p57
      %p59 = scmp.ne.s32.totalorder %s48, %s49
      %p60 = scmp.eq.s32.totalorder %s26, 0
      %p61 = por %p59, %p60
      %p62 = scmp.ne.s32.totalorder %s48, %s49
      %p63 = scmp.eq.s32.totalorder %s27, 1
      %p64 = por %p62, %p63
      %p66 = scmp.ne.s32.totalorder %s49, %s65
      %p67 = scmp.eq.s32.totalorder %s27, 0
      %p68 = por %p66, %p67
      %s70 = sadd.s32 %s69, 1
      %p73 = scmp.eq.s32.totalorder %s21, 1
      %p74 = scmp.ne.s32.totalorder %s69, %s71
      %p75 = scmp.eq.s32.totalorder %s21, 0
      %p76 = por %p74, %p75
      %p77 = scmp.ne.s32.totalorder %s69, %s71
      %p78 = scmp.eq.s32.totalorder %s26, 1
      %p79 = por %p77, %p78
      %p80 = scmp.ne.s32.totalorder %s71, %s72
      %p81 = scmp.eq.s32.totalorder %s26, 0
      %p82 = por %p80, %p81
      %p83 = scmp.ne.s32.totalorder %s71, %s72
      %p84 = scmp.eq.s32.totalorder %s27, 1
      %p85 = por %p83, %p84
      %p87 = scmp.ne.s32.totalorder %s72, %s86
      %p88 = scmp.eq.s32.totalorder %s27, 0
      %p89 = por %p87, %p88
      %s91 = sadd.s32 %s90, 1
      %p94 = scmp.eq.s32.totalorder %s21, 1
      %p95 = scmp.ne.s32.totalorder %s90, %s92
      %p96 = scmp.eq.s32.totalorder %s21, 0
      %p97 = por %p95, %p96
      %p98 = scmp.ne.s32.totalorder %s90, %s92
      %p99 = scmp.eq.s32.totalorder %s26, 1
      %p100 = por %p98, %p99
      %p101 = scmp.ne.s32.totalorder %s92, %s93
      %p102 = scmp.eq.s32.totalorder %s26, 0
      %p103 = por %p101, %p102
      %p104 = scmp.ne.s32.totalorder %s92, %s93
      %p105 = scmp.eq.s32.totalorder %s27, 1
      %p106 = por %p104, %p105
      %p108 = scmp.ne.s32.totalorder %s93, %s107
      %p109 = scmp.eq.s32.totalorder %s27, 0
      %p110 = por %p108, %p109
      %s112 = sadd.s32 %s111, 1
      %p115 = scmp.eq.s32.totalorder %s21, 1
      %p116 = scmp.ne.s32.totalorder %s111, %s113
      %p117 = scmp.eq.s32.totalorder %s21, 0
      %p118 = por %p116, %p117
      %p119 = scmp.ne.s32.totalorder %s111, %s113
      %p120 = scmp.eq.s32.totalorder %s26, 1
      %p121 = por %p119, %p120
      %p122 = scmp.ne.s32.totalorder %s113, %s114
      %p123 = scmp.eq.s32.totalorder %s26, 0
      %p124 = por %p122, %p123
      %p125 = scmp.ne.s32.totalorder %s113, %s114
      %p126 = scmp.eq.s32.totalorder %s27, 1
      %p127 = por %p125, %p126
      %p129 = scmp.ne.s32.totalorder %s114, %s128
      %p130 = scmp.eq.s32.totalorder %s27, 0
      %p131 = por %p129, %p130
      %s133 = sadd.s32 %s132, 1
      %p136 = scmp.eq.s32.totalorder %s21, 1
      %p137 = scmp.ne.s32.totalorder %s132, %s134
      %p138 = scmp.eq.s32.totalorder %s21, 0
      %p139 = por %p137, %p138
      %p140 = scmp.ne.s32.totalorder %s132, %s134
      %p141 = scmp.eq.s32.totalorder %s26, 1
      %p142 = por %p140, %p141
      %p143 = scmp.ne.s32.totalorder %s134, %s135
      %p144 = scmp.eq.s32.totalorder %s26, 0
      %p145 = por %p143, %p144
      %p146 = scmp.ne.s32.totalorder %s134, %s135
      %p147 = scmp.eq.s32.totalorder %s27, 1
      %p148 = por %p146, %p147
      %p150 = scmp.ne.s32.totalorder %s135, %s149
      %p151 = scmp.eq.s32.totalorder %s27, 0
      %p152 = por %p150, %p151
      %s154 = sadd.s32 %s153, 1
      %p157 = scmp.eq.s32.totalorder %s21, 1
      %p158 = scmp.ne.s32.totalorder %s153, %s155
      %p159 = scmp.eq.s32.totalorder %s21, 0
      %p160 = por %p158, %p159
      %p161 = scmp.ne.s32.totalorder %s153, %s155
      %p162 = scmp.eq.s32.totalorder %s26, 1
      %p163 = por %p161, %p162
      %p164 = scmp.ne.s32.totalorder %s155, %s156
      %p165 = scmp.eq.s32.totalorder %s26, 0
      %p166 = por %p164, %p165
      %p167 = scmp.ne.s32.totalorder %s155, %s156
      %p168 = scmp.eq.s32.totalorder %s27, 1
      %p169 = por %p167, %p168
      %p171 = scmp.ne.s32.totalorder %s156, %s170
      %p172 = scmp.eq.s32.totalorder %s27, 0
      %p173 = por %p171, %p172
      %s174 = ssub.s32 %s28, %s40
      %s175 = ssub.s32 %s29, %s36
      %s176 = sor.u32 %s174, %s175
      %p177 = scmp.eq.s32.totalorder %s176, 0
      %s179 = sadd.s32 %s178, 1
      %s180 = scalar_select %p177, %s178, %s179
      %p183 = pneg %p177
      %p184 = scmp.eq.s32.totalorder %s21, 1
      %p185 = por %p183, %p184
      %p186 = scmp.ne.s32.totalorder %s178, %s181
      %p187 = scmp.eq.s32.totalorder %s21, 0
      %p188 = por %p186, %p187
      %p189 = scmp.ne.s32.totalorder %s178, %s181
      %p190 = scmp.eq.s32.totalorder %s26, 1
      %p191 = por %p189, %p190
      %p192 = scmp.ne.s32.totalorder %s181, %s182
      %p193 = scmp.eq.s32.totalorder %s26, 0
      %p194 = por %p192, %p193
      %p195 = scmp.ne.s32.totalorder %s181, %s182
      %p196 = scmp.eq.s32.totalorder %s27, 1
      %p197 = por %p195, %p196
      %p199 = scmp.ne.s32.totalorder %s182, %s198
      %p200 = scmp.eq.s32.totalorder %s27, 0
      %p201 = por %p199, %p200
      %p202 = scmp.le.s32.totalorder 1, %s21
      %p203 = scmp.lt.s32.totalorder %s21, 3
      %p204 = pnand %p202, %p203
      %p205 = pneg %p204
      // Predicated region
      $region9: #{tpu_custom_call.1} parent=5 // pred_check
        _
      $region10: #{tpu_custom_call.1} parent=5 // pred_check_branch
        %207 = sbr.rel (%p204) target = $region12
      $region11: #{tpu_custom_call.1} parent=5 // pred_region
        %s208 = ssub.s32 %s21, 1
        // Predicated region
        $region13: #{tpu_custom_call.1} parent=11 // pred_check
          %p209 = pneg %p82
        $region14: #{tpu_custom_call.1} parent=11 // pred_check_branch
          %211 = sbr.rel (%p209) target = $region16
        $region15: #{tpu_custom_call.1} parent=11 // pred_region
          %s213 = ssub.s32 64, 64
          %214 = vsyncadd [#allocation6], %s213
          %217 = dma.hbm_to_smem %s1, 64, [#allocation8], [#allocation6]
        $region16: #{tpu_custom_call.1} parent=11 // pred_fallthru
          _
        // Predicated region
        $region17: #{tpu_custom_call.1} parent=11 // pred_check
          %p218 = pneg %p103
        $region18: #{tpu_custom_call.1} parent=11 // pred_check_branch
          %220 = sbr.rel (%p218) target = $region20
        $region19: #{tpu_custom_call.1} parent=11 // pred_region
          %s222 = ssub.s32 16, 16
          %223 = vsyncadd [#allocation7], %s222
          %s225 = sshll.u32 %s2, 4
          %s226 = int_to_ptr.vmem [resolvable:$true] %s225
          %228 = dma.vmem_to_smem %s226, 16, [#allocation9], [#allocation7]
        $region20: #{tpu_custom_call.1} parent=11 // pred_fallthru
          _
        // Predicated region
        $region21: #{tpu_custom_call.1} parent=11 // pred_check
          %p229 = pneg %p124
        $region22: #{tpu_custom_call.1} parent=11 // pred_check_branch
          %231 = sbr.rel (%p229) target = $region24
        $region23: #{tpu_custom_call.1} parent=11 // pred_region
          _
        $region24: #{tpu_custom_call.1} parent=11 // pred_fallthru
          _
        // Predicated region
        $region25: #{tpu_custom_call.1} parent=11 // pred_check
          %p232 = pneg %p145
        $region26: #{tpu_custom_call.1} parent=11 // pred_check_branch
          %234 = sbr.rel (%p232) target = $region28
        $region27: #{tpu_custom_call.1} parent=11 // pred_region
          _
        $region28: #{tpu_custom_call.1} parent=11 // pred_fallthru
          _
        // Predicated region
        $region29: #{tpu_custom_call.1} parent=11 // pred_check
          %p235 = pneg %p166
        $region30: #{tpu_custom_call.1} parent=11 // pred_check_branch
          %237 = sbr.rel (%p235) target = $region32
        $region31: #{tpu_custom_call.1} parent=11 // pred_region
          _
        $region32: #{tpu_custom_call.1} parent=11 // pred_fallthru
          _
      $region12: #{tpu_custom_call.1} parent=5 // pred_fallthru
        _
      %p238 = scmp.lt.s32.totalorder %s21, 2
      // Predicated region
      $region33: #{tpu_custom_call.1} parent=5 // pred_check
        %p239 = pneg %p238
      $region34: #{tpu_custom_call.1} parent=5 // pred_check_branch
        %241 = sbr.rel (%p239) target = $region36
      $region35: #{tpu_custom_call.1} parent=5 // pred_region
        // Predicated region
        $region37: #{tpu_custom_call.1} parent=35 // pred_check
          %p242 = pneg %p55
        $region38: #{tpu_custom_call.1} parent=35 // pred_check_branch
          %244 = sbr.rel (%p242) target = $region40
        $region39: #{tpu_custom_call.1} parent=35 // pred_region
          %s245 = sand.u32 %s45, 1
          %s246 = scalar_lea.sflag [#allocation4], %s245
          %s247 = sand.u32 %s45, 1
          %s248 = smul.addr %s247, 512
          %s249 = scalar_lea.vmem [#allocation3], %s248
          %s251 = ssub.s32 8192, 8192
          %252 = vsyncadd %s246, %s251
          %s253 = smul.addr %s29, 2
          %s254 = smul.addr %s28, 64
          %s255 = sadd.s32 %s253, %s254
          %s256 = smul.addr %s255, 128
          %s257 = scalar_lea.hbm %s0, %s256
          %s258 = sshll.u32 %s249, 4
          %s259 = int_to_ptr.vmem [resolvable:$true] %s258
          %264 = dma.hbm_to_vmem [thread:$0]  %s257, 8192, %s259, %s246, 256, 256, 16
        $region40: #{tpu_custom_call.1} parent=35 // pred_fallthru
          _
      $region36: #{tpu_custom_call.1} parent=5 // pred_fallthru
        _
      %p265 = scmp.le.s32.totalorder 1, %s21
      %p266 = scmp.lt.s32.totalorder %s21, 3
      %p267 = pnand %p265, %p266
      %p268 = pneg %p267
      // Predicated region
      $region41: #{tpu_custom_call.1} parent=5 // pred_check
        _
      $region42: #{tpu_custom_call.1} parent=5 // pred_check_branch
        %270 = sbr.rel (%p267) target = $region44
      $region43: #{tpu_custom_call.1} parent=5 // pred_region
        %s271 = ssub.s32 %s21, 1
        %s272 = sand.u32 %s48, 1
        %s273 = scalar_lea.sflag [#allocation4], %s272
        %s274 = sand.u32 %s48, 1
        %s275 = smul.addr %s274, 512
        %s276 = scalar_lea.vmem [#allocation3], %s275
        // Predicated region
        $region45: #{tpu_custom_call.1} parent=43 // pred_check
          %p277 = pneg %p61
        $region46: #{tpu_custom_call.1} parent=43 // pred_check_branch
          %279 = sbr.rel (%p277) target = $region48
        $region47: #{tpu_custom_call.1} parent=43 // pred_region
          %280 = dma.done %s273, 8192
        $region48: #{tpu_custom_call.1} parent=43 // pred_fallthru
          _
        // Predicated region
        $region49: #{tpu_custom_call.1} parent=43 // pred_check
          %p281 = pneg %p82
        $region50: #{tpu_custom_call.1} parent=43 // pred_check_branch
          %283 = sbr.rel (%p281) target = $region52
        $region51: #{tpu_custom_call.1} parent=43 // pred_region
          %284 = dma.done [#allocation6], 64
        $region52: #{tpu_custom_call.1} parent=43 // pred_fallthru
          _
        // Predicated region
        $region53: #{tpu_custom_call.1} parent=43 // pred_check
          %p285 = pneg %p103
        $region54: #{tpu_custom_call.1} parent=43 // pred_check_branch
          %287 = sbr.rel (%p285) target = $region56
        $region55: #{tpu_custom_call.1} parent=43 // pred_region
          %288 = dma.done [#allocation7], 16
        $region56: #{tpu_custom_call.1} parent=43 // pred_fallthru
          _
        %289 = sfence
        %s290 = sand.u32 %s48, 1
        %s291 = scalar_lea.sflag [#allocation4], %s290
        %s292 = sand.u32 %s48, 1
        %s293 = smul.addr %s292, 512
        %s294 = scalar_lea.vmem [#allocation3], %s293
        %p295 = pneg %p61
        %p296 = pneg %p58
        %p297 = pneg %p82
        %p298 = pneg %p79
        %p299 = pneg %p103
        %p300 = pneg %p100
        %p301 = pneg %p124
        %p302 = pneg %p121
        %p303 = pneg %p145
        %p304 = pneg %p142
        %p305 = pneg %p166
        %p306 = pneg %p163
        %p307 = pneg %p194
        %p308 = pneg %p191
        %s309 = sand.u32 %s181, 1
        %s310 = scalar_lea.sflag [#allocation5], %s309
        %s311 = sand.u32 %s181, 1
        %s312 = smul.addr %s311, 64
        %s313 = scalar_lea.vmem [#allocation10], %s312
        %s314 = sld [smem:[#allocation2]]
        %s315 = sld [smem:[#allocation9]]
        %s316 = sld [smem:[#allocation9 + $0x1]]
        %s317 = sld [smem:[#allocation9 + $0x2]]
        %s318 = sld [smem:[#allocation9 + $0x3]]
        %v319 = vstv %s315
        %v320 = vstv %s316
        %v321 = vstv %s317
        %v322 = vstv %s318
        %v323 = vld [vmem:[%s276] sm:$0xff]
        %v324 = vld [vmem:[%s276 + $0x8] sm:$0xff]
        %s325 = sld [smem:[#allocation8]]
        %v326 = vstv %s325
        %v327 = vmul.f32 %v326, %v323
        %v328 = vmul.f32 %v326, %v324
        %v329 = vadd.f32 %v319, %v327
        %v330 = vadd.f32 %v319, %v328
        %s331 = sld [smem:[#allocation8 + $0x80]]
        %v332 = vstv %s331
        %v333 = vmul.f32 %v332, %v323
        %v334 = vmul.f32 %v332, %v324
        %v335 = vadd.f32 %v320, %v333
        %v336 = vadd.f32 %v320, %v334
        %s337 = sld [smem:[#allocation8 + $0x100]]
        %v338 = vstv %s337
        %v339 = vmul.f32 %v338, %v323
        %v340 = vmul.f32 %v338, %v324
        %v341 = vadd.f32 %v321, %v339
        %v342 = vadd.f32 %v321, %v340
        %s343 = sld [smem:[#allocation8 + $0x180]]
        %v344 = vstv %s343
        %v345 = vmul.f32 %v344, %v323
        %v346 = vmul.f32 %v344, %v324
        %v347 = vadd.f32 %v322, %v345
        %v348 = vadd.f32 %v322, %v346
        %s349 = scalar_lea.vmem %s276, 16 [#allocation3]
        %v350 = vld [vmem:[%s349] sm:$0xff]
        %v351 = vld [vmem:[%s349 + $0x8] sm:$0xff]
        %s352 = sld [smem:[#allocation8 + $0x1]]
        %v353 = vstv %s352
        %v354 = vmul.f32 %v353, %v350
        %v355 = vmul.f32 %v353, %v351
        %v356 = vadd.f32 %v329, %v354
        %v357 = vadd.f32 %v330, %v355
        %s358 = sld [smem:[#allocation8 + $0x81]]
        %v359 = vstv %s358
        %v360 = vmul.f32 %v359, %v350
        %v361 = vmul.f32 %v359, %v351
        %v362 = vadd.f32 %v335, %v360
        %v363 = vadd.f32 %v336, %v361
        %s364 = sld [smem:[#allocation8 + $0x101]]
        %v365 = vstv %s364
        %v366 = vmul.f32 %v365, %v350
        %v367 = vmul.f32 %v365, %v351
        %v368 = vadd.f32 %v341, %v366
        %v369 = vadd.f32 %v342, %v367
        %s370 = sld [smem:[#allocation8 + $0x181]]
        %v371 = vstv %s370
        %v372 = vmul.f32 %v371, %v350
        %v373 = vmul.f32 %v371, %v351
        %v374 = vadd.f32 %v347, %v372
        %v375 = vadd.f32 %v348, %v373
        %s376 = scalar_lea.vmem %s276, 32 [#allocation3]
        %v377 = vld [vmem:[%s376] sm:$0xff]
        %v378 = vld [vmem:[%s376 + $0x8] sm:$0xff]
        %s379 = sld [smem:[#allocation8 + $0x2]]
        %v380 = vstv %s379
        %v381 = vmul.f32 %v380, %v377
        %v382 = vmul.f32 %v380, %v378
        %v383 = vadd.f32 %v356, %v381
        %v384 = vadd.f32 %v357, %v382
        %s385 = sld [smem:[#allocation8 + $0x82]]
        %v386 = vstv %s385
        %v387 = vmul.f32 %v386, %v377
        %v388 = vmul.f32 %v386, %v378
        %v389 = vadd.f32 %v362, %v387
        %v390 = vadd.f32 %v363, %v388
        %s391 = sld [smem:[#allocation8 + $0x102]]
        %v392 = vstv %s391
        %v393 = vmul.f32 %v392, %v377
        %v394 = vmul.f32 %v392, %v378
        %v395 = vadd.f32 %v368, %v393
        %v396 = vadd.f32 %v369, %v394
        %s397 = sld [smem:[#allocation8 + $0x182]]
        %v398 = vstv %s397
        %v399 = vmul.f32 %v398, %v377
        %v400 = vmul.f32 %v398, %v378
        %v401 = vadd.f32 %v374, %v399
        %v402 = vadd.f32 %v375, %v400
        %s403 = scalar_lea.vmem %s276, 48 [#allocation3]
        %v404 = vld [vmem:[%s403] sm:$0xff]
        %v405 = vld [vmem:[%s403 + $0x8] sm:$0xff]
        %s406 = sld [smem:[#allocation8 + $0x3]]
        %v407 = vstv %s406
        %v408 = vmul.f32 %v407, %v404
        %v409 = vmul.f32 %v407, %v405
        %v410 = vadd.f32 %v383, %v408
        %v411 = vadd.f32 %v384, %v409
        %s412 = sld [smem:[#allocation8 + $0x83]]
        %v413 = vstv %s412
        %v414 = vmul.f32 %v413, %v404
        %v415 = vmul.f32 %v413, %v405
        %v416 = vadd.f32 %v389, %v414
        %v417 = vadd.f32 %v390, %v415
        %s418 = sld [smem:[#allocation8 + $0x103]]
        %v419 = vstv %s418
        %v420 = vmul.f32 %v419, %v404
        %v421 = vmul.f32 %v419, %v405
        %v422 = vadd.f32 %v395, %v420
        %v423 = vadd.f32 %v396, %v421
        %s424 = sld [smem:[#allocation8 + $0x183]]
        %v425 = vstv %s424
        %v426 = vmul.f32 %v425, %v404
        %v427 = vmul.f32 %v425, %v405
        %v428 = vadd.f32 %v401, %v426
        %v429 = vadd.f32 %v402, %v427
        %s430 = scalar_lea.vmem %s276, 64 [#allocation3]
        %v431 = vld [vmem:[%s430] sm:$0xff]
        %v432 = vld [vmem:[%s430 + $0x8] sm:$0xff]
        %s433 = sld [smem:[#allocation8 + $0x4]]
        %v434 = vstv %s433
        %v435 = vmul.f32 %v434, %v431
        %v436 = vmul.f32 %v434, %v432
        %v437 = vadd.f32 %v410, %v435
        %v438 = vadd.f32 %v411, %v436
        %s439 = sld [smem:[#allocation8 + $0x84]]
        %v440 = vstv %s439
        %v441 = vmul.f32 %v440, %v431
        %v442 = vmul.f32 %v440, %v432
        %v443 = vadd.f32 %v416, %v441
        %v444 = vadd.f32 %v417, %v442
        %s445 = sld [smem:[#allocation8 + $0x104]]
        %v446 = vstv %s445
        %v447 = vmul.f32 %v446, %v431
        %v448 = vmul.f32 %v446, %v432
        %v449 = vadd.f32 %v422, %v447
        %v450 = vadd.f32 %v423, %v448
        %s451 = sld [smem:[#allocation8 + $0x184]]
        %v452 = vstv %s451
        %v453 = vmul.f32 %v452, %v431
        %v454 = vmul.f32 %v452, %v432
        %v455 = vadd.f32 %v428, %v453
        %v456 = vadd.f32 %v429, %v454
        %s457 = scalar_lea.vmem %s276, 80 [#allocation3]
        %v458 = vld [vmem:[%s457] sm:$0xff]
        %v459 = vld [vmem:[%s457 + $0x8] sm:$0xff]
        %s460 = sld [smem:[#allocation8 + $0x5]]
        %v461 = vstv %s460
        %v462 = vmul.f32 %v461, %v458
        %v463 = vmul.f32 %v461, %v459
        %v464 = vadd.f32 %v437, %v462
        %v465 = vadd.f32 %v438, %v463
        %s466 = sld [smem:[#allocation8 + $0x85]]
        %v467 = vstv %s466
        %v468 = vmul.f32 %v467, %v458
        %v469 = vmul.f32 %v467, %v459
        %v470 = vadd.f32 %v443, %v468
        %v471 = vadd.f32 %v444, %v469
        %s472 = sld [smem:[#allocation8 + $0x105]]
        %v473 = vstv %s472
        %v474 = vmul.f32 %v473, %v458
        %v475 = vmul.f32 %v473, %v459
        %v476 = vadd.f32 %v449, %v474
        %v477 = vadd.f32 %v450, %v475
        %s478 = sld [smem:[#allocation8 + $0x185]]
        %v479 = vstv %s478
        %v480 = vmul.f32 %v479, %v458
        %v481 = vmul.f32 %v479, %v459
        %v482 = vadd.f32 %v455, %v480
        %v483 = vadd.f32 %v456, %v481
        %s484 = scalar_lea.vmem %s276, 96 [#allocation3]
        %v485 = vld [vmem:[%s484] sm:$0xff]
        %v486 = vld [vmem:[%s484 + $0x8] sm:$0xff]
        %s487 = sld [smem:[#allocation8 + $0x6]]
        %v488 = vstv %s487
        %v489 = vmul.f32 %v488, %v485
        %v490 = vmul.f32 %v488, %v486
        %v491 = vadd.f32 %v464, %v489
        %v492 = vadd.f32 %v465, %v490
        %s493 = sld [smem:[#allocation8 + $0x86]]
        %v494 = vstv %s493
        %v495 = vmul.f32 %v494, %v485
        %v496 = vmul.f32 %v494, %v486
        %v497 = vadd.f32 %v470, %v495
        %v498 = vadd.f32 %v471, %v496
        %s499 = sld [smem:[#allocation8 + $0x106]]
        %v500 = vstv %s499
        %v501 = vmul.f32 %v500, %v485
        %v502 = vmul.f32 %v500, %v486
        %v503 = vadd.f32 %v476, %v501
        %v504 = vadd.f32 %v477, %v502
        %s505 = sld [smem:[#allocation8 + $0x186]]
        %v506 = vstv %s505
        %v507 = vmul.f32 %v506, %v485
        %v508 = vmul.f32 %v506, %v486
        %v509 = vadd.f32 %v482, %v507
        %v510 = vadd.f32 %v483, %v508
        %s511 = scalar_lea.vmem %s276, 112 [#allocation3]
        %v512 = vld [vmem:[%s511] sm:$0xff]
        %v513 = vld [vmem:[%s511 + $0x8] sm:$0xff]
        %s514 = sld [smem:[#allocation8 + $0x7]]
        %v515 = vstv %s514
        %v516 = vmul.f32 %v515, %v512
        %v517 = vmul.f32 %v515, %v513
        %v518 = vadd.f32 %v491, %v516
        %v519 = vadd.f32 %v492, %v517
        %s520 = sld [smem:[#allocation8 + $0x87]]
        %v521 = vstv %s520
        %v522 = vmul.f32 %v521, %v512
        %v523 = vmul.f32 %v521, %v513
        %v524 = vadd.f32 %v497, %v522
        %v525 = vadd.f32 %v498, %v523
        %s526 = sld [smem:[#allocation8 + $0x107]]
        %v527 = vstv %s526
        %v528 = vmul.f32 %v527, %v512
        %v529 = vmul.f32 %v527, %v513
        %v530 = vadd.f32 %v503, %v528
        %v531 = vadd.f32 %v504, %v529
        %s532 = sld [smem:[#allocation8 + $0x187]]
        %v533 = vstv %s532
        %v534 = vmul.f32 %v533, %v512
        %v535 = vmul.f32 %v533, %v513
        %v536 = vadd.f32 %v509, %v534
        %v537 = vadd.f32 %v510, %v535
        %s538 = scalar_lea.vmem %s276, 128 [#allocation3]
        %v539 = vld [vmem:[%s538] sm:$0xff]
        %v540 = vld [vmem:[%s538 + $0x8] sm:$0xff]
        %s541 = sld [smem:[#allocation8 + $0x8]]
        %v542 = vstv %s541
        %v543 = vmul.f32 %v542, %v539
        %v544 = vmul.f32 %v542, %v540
        %v545 = vadd.f32 %v518, %v543
        %v546 = vadd.f32 %v519, %v544
        %s547 = sld [smem:[#allocation8 + $0x88]]
        %v548 = vstv %s547
        %v549 = vmul.f32 %v548, %v539
        %v550 = vmul.f32 %v548, %v540
        %v551 = vadd.f32 %v524, %v549
        %v552 = vadd.f32 %v525, %v550
        %s553 = sld [smem:[#allocation8 + $0x108]]
        %v554 = vstv %s553
        %v555 = vmul.f32 %v554, %v539
        %v556 = vmul.f32 %v554, %v540
        %v557 = vadd.f32 %v530, %v555
        %v558 = vadd.f32 %v531, %v556
        %s559 = sld [smem:[#allocation8 + $0x188]]
        %v560 = vstv %s559
        %v561 = vmul.f32 %v560, %v539
        %v562 = vmul.f32 %v560, %v540
        %v563 = vadd.f32 %v536, %v561
        %v564 = vadd.f32 %v537, %v562
        %s565 = scalar_lea.vmem %s276, 144 [#allocation3]
        %v566 = vld [vmem:[%s565] sm:$0xff]
        %v567 = vld [vmem:[%s565 + $0x8] sm:$0xff]
        %s568 = sld [smem:[#allocation8 + $0x9]]
        %v569 = vstv %s568
        %v570 = vmul.f32 %v569, %v566
        %v571 = vmul.f32 %v569, %v567
        %v572 = vadd.f32 %v545, %v570
        %v573 = vadd.f32 %v546, %v571
        %s574 = sld [smem:[#allocation8 + $0x89]]
        %v575 = vstv %s574
        %v576 = vmul.f32 %v575, %v566
        %v577 = vmul.f32 %v575, %v567
        %v578 = vadd.f32 %v551, %v576
        %v579 = vadd.f32 %v552, %v577
        %s580 = sld [smem:[#allocation8 + $0x109]]
        %v581 = vstv %s580
        %v582 = vmul.f32 %v581, %v566
        %v583 = vmul.f32 %v581, %v567
        %v584 = vadd.f32 %v557, %v582
        %v585 = vadd.f32 %v558, %v583
        %s586 = sld [smem:[#allocation8 + $0x189]]
        %v587 = vstv %s586
        %v588 = vmul.f32 %v587, %v566
        %v589 = vmul.f32 %v587, %v567
        %v590 = vadd.f32 %v563, %v588
        %v591 = vadd.f32 %v564, %v589
        %s592 = scalar_lea.vmem %s276, 160 [#allocation3]
        %v593 = vld [vmem:[%s592] sm:$0xff]
        %v594 = vld [vmem:[%s592 + $0x8] sm:$0xff]
        %s595 = sld [smem:[#allocation8 + $0xa]]
        %v596 = vstv %s595
        %v597 = vmul.f32 %v596, %v593
        %v598 = vmul.f32 %v596, %v594
        %v599 = vadd.f32 %v572, %v597
        %v600 = vadd.f32 %v573, %v598
        %s601 = sld [smem:[#allocation8 + $0x8a]]
        %v602 = vstv %s601
        %v603 = vmul.f32 %v602, %v593
        %v604 = vmul.f32 %v602, %v594
        %v605 = vadd.f32 %v578, %v603
        %v606 = vadd.f32 %v579, %v604
        %s607 = sld [smem:[#allocation8 + $0x10a]]
        %v608 = vstv %s607
        %v609 = vmul.f32 %v608, %v593
        %v610 = vmul.f32 %v608, %v594
        %v611 = vadd.f32 %v584, %v609
        %v612 = vadd.f32 %v585, %v610
        %s613 = sld [smem:[#allocation8 + $0x18a]]
        %v614 = vstv %s613
        %v615 = vmul.f32 %v614, %v593
        %v616 = vmul.f32 %v614, %v594
        %v617 = vadd.f32 %v590, %v615
        %v618 = vadd.f32 %v591, %v616
        %s619 = scalar_lea.vmem %s276, 176 [#allocation3]
        %v620 = vld [vmem:[%s619] sm:$0xff]
        %v621 = vld [vmem:[%s619 + $0x8] sm:$0xff]
        %s622 = sld [smem:[#allocation8 + $0xb]]
        %v623 = vstv %s622
        %v624 = vmul.f32 %v623, %v620
        %v625 = vmul.f32 %v623, %v621
        %v626 = vadd.f32 %v599, %v624
        %v627 = vadd.f32 %v600, %v625
        %s628 = sld [smem:[#allocation8 + $0x8b]]
        %v629 = vstv %s628
        %v630 = vmul.f32 %v629, %v620
        %v631 = vmul.f32 %v629, %v621
        %v632 = vadd.f32 %v605, %v630
        %v633 = vadd.f32 %v606, %v631
        %s634 = sld [smem:[#allocation8 + $0x10b]]
        %v635 = vstv %s634
        %v636 = vmul.f32 %v635, %v620
        %v637 = vmul.f32 %v635, %v621
        %v638 = vadd.f32 %v611, %v636
        %v639 = vadd.f32 %v612, %v637
        %s640 = sld [smem:[#allocation8 + $0x18b]]
        %v641 = vstv %s640
        %v642 = vmul.f32 %v641, %v620
        %v643 = vmul.f32 %v641, %v621
        %v644 = vadd.f32 %v617, %v642
        %v645 = vadd.f32 %v618, %v643
        %s646 = scalar_lea.vmem %s276, 192 [#allocation3]
        %v647 = vld [vmem:[%s646] sm:$0xff]
        %v648 = vld [vmem:[%s646 + $0x8] sm:$0xff]
        %s649 = sld [smem:[#allocation8 + $0xc]]
        %v650 = vstv %s649
        %v651 = vmul.f32 %v650, %v647
        %v652 = vmul.f32 %v650, %v648
        %v653 = vadd.f32 %v626, %v651
        %v654 = vadd.f32 %v627, %v652
        %s655 = sld [smem:[#allocation8 + $0x8c]]
        %v656 = vstv %s655
        %v657 = vmul.f32 %v656, %v647
        %v658 = vmul.f32 %v656, %v648
        %v659 = vadd.f32 %v632, %v657
        %v660 = vadd.f32 %v633, %v658
        %s661 = sld [smem:[#allocation8 + $0x10c]]
        %v662 = vstv %s661
        %v663 = vmul.f32 %v662, %v647
        %v664 = vmul.f32 %v662, %v648
        %v665 = vadd.f32 %v638, %v663
        %v666 = vadd.f32 %v639, %v664
        %s667 = sld [smem:[#allocation8 + $0x18c]]
        %v668 = vstv %s667
        %v669 = vmul.f32 %v668, %v647
        %v670 = vmul.f32 %v668, %v648
        %v671 = vadd.f32 %v644, %v669
        %v672 = vadd.f32 %v645, %v670
        %s673 = scalar_lea.vmem %s276, 208 [#allocation3]
        %v674 = vld [vmem:[%s673] sm:$0xff]
        %v675 = vld [vmem:[%s673 + $0x8] sm:$0xff]
        %s676 = sld [smem:[#allocation8 + $0xd]]
        %v677 = vstv %s676
        %v678 = vmul.f32 %v677, %v674
        %v679 = vmul.f32 %v677, %v675
        %v680 = vadd.f32 %v653, %v678
        %v681 = vadd.f32 %v654, %v679
        %s682 = sld [smem:[#allocation8 + $0x8d]]
        %v683 = vstv %s682
        %v684 = vmul.f32 %v683, %v674
        %v685 = vmul.f32 %v683, %v675
        %v686 = vadd.f32 %v659, %v684
        %v687 = vadd.f32 %v660, %v685
        %s688 = sld [smem:[#allocation8 + $0x10d]]
        %v689 = vstv %s688
        %v690 = vmul.f32 %v689, %v674
        %v691 = vmul.f32 %v689, %v675
        %v692 = vadd.f32 %v665, %v690
        %v693 = vadd.f32 %v666, %v691
        %s694 = sld [smem:[#allocation8 + $0x18d]]
        %v695 = vstv %s694
        %v696 = vmul.f32 %v695, %v674
        %v697 = vmul.f32 %v695, %v675
        %v698 = vadd.f32 %v671, %v696
        %v699 = vadd.f32 %v672, %v697
        %s700 = scalar_lea.vmem %s276, 224 [#allocation3]
        %v701 = vld [vmem:[%s700] sm:$0xff]
        %v702 = vld [vmem:[%s700 + $0x8] sm:$0xff]
        %s703 = sld [smem:[#allocation8 + $0xe]]
        %v704 = vstv %s703
        %v705 = vmul.f32 %v704, %v701
        %v706 = vmul.f32 %v704, %v702
        %v707 = vadd.f32 %v680, %v705
        %v708 = vadd.f32 %v681, %v706
        %s709 = sld [smem:[#allocation8 + $0x8e]]
        %v710 = vstv %s709
        %v711 = vmul.f32 %v710, %v701
        %v712 = vmul.f32 %v710, %v702
        %v713 = vadd.f32 %v686, %v711
        %v714 = vadd.f32 %v687, %v712
        %s715 = sld [smem:[#allocation8 + $0x10e]]
        %v716 = vstv %s715
        %v717 = vmul.f32 %v716, %v701
        %v718 = vmul.f32 %v716, %v702
        %v719 = vadd.f32 %v692, %v717
        %v720 = vadd.f32 %v693, %v718
        %s721 = sld [smem:[#allocation8 + $0x18e]]
        %v722 = vstv %s721
        %v723 = vmul.f32 %v722, %v701
        %v724 = vmul.f32 %v722, %v702
        %v725 = vadd.f32 %v698, %v723
        %v726 = vadd.f32 %v699, %v724
        %s727 = scalar_lea.vmem %s276, 240 [#allocation3]
        %v728 = vld [vmem:[%s727] sm:$0xff]
        %v729 = vld [vmem:[%s727 + $0x8] sm:$0xff]
        %s730 = sld [smem:[#allocation8 + $0xf]]
        %v731 = vstv %s730
        %v732 = vmul.f32 %v731, %v728
        %v733 = vmul.f32 %v731, %v729
        %v734 = vadd.f32 %v707, %v732
        %v735 = vadd.f32 %v708, %v733
        %s736 = sld [smem:[#allocation8 + $0x8f]]
        %v737 = vstv %s736
        %v738 = vmul.f32 %v737, %v728
        %v739 = vmul.f32 %v737, %v729
        %v740 = vadd.f32 %v713, %v738
        %v741 = vadd.f32 %v714, %v739
        %s742 = sld [smem:[#allocation8 + $0x10f]]
        %v743 = vstv %s742
        %v744 = vmul.f32 %v743, %v728
        %v745 = vmul.f32 %v743, %v729
        %v746 = vadd.f32 %v719, %v744
        %v747 = vadd.f32 %v720, %v745
        %s748 = sld [smem:[#allocation8 + $0x18f]]
        %v749 = vstv %s748
        %v750 = vmul.f32 %v749, %v728
        %v751 = vmul.f32 %v749, %v729
        %v752 = vadd.f32 %v725, %v750
        %v753 = vadd.f32 %v726, %v751
        %s754 = scalar_lea.vmem %s276, 256 [#allocation3]
        %v755 = vld [vmem:[%s754] sm:$0xff]
        %v756 = vld [vmem:[%s754 + $0x8] sm:$0xff]
        %s757 = sld [smem:[#allocation8 + $0x10]]
        %v758 = vstv %s757
        %v759 = vmul.f32 %v758, %v755
        %v760 = vmul.f32 %v758, %v756
        %v761 = vadd.f32 %v734, %v759
        %v762 = vadd.f32 %v735, %v760
        %s763 = sld [smem:[#allocation8 + $0x90]]
        %v764 = vstv %s763
        %v765 = vmul.f32 %v764, %v755
        %v766 = vmul.f32 %v764, %v756
        %v767 = vadd.f32 %v740, %v765
        %v768 = vadd.f32 %v741, %v766
        %s769 = sld [smem:[#allocation8 + $0x110]]
        %v770 = vstv %s769
        %v771 = vmul.f32 %v770, %v755
        %v772 = vmul.f32 %v770, %v756
        %v773 = vadd.f32 %v746, %v771
        %v774 = vadd.f32 %v747, %v772
        %s775 = sld [smem:[#allocation8 + $0x190]]
        %v776 = vstv %s775
        %v777 = vmul.f32 %v776, %v755
        %v778 = vmul.f32 %v776, %v756
        %v779 = vadd.f32 %v752, %v777
        %v780 = vadd.f32 %v753, %v778
        %s781 = scalar_lea.vmem %s276, 272 [#allocation3]
        %v782 = vld [vmem:[%s781] sm:$0xff]
        %v783 = vld [vmem:[%s781 + $0x8] sm:$0xff]
        %s784 = sld [smem:[#allocation8 + $0x11]]
        %v785 = vstv %s784
        %v786 = vmul.f32 %v785, %v782
        %v787 = vmul.f32 %v785, %v783
        %v788 = vadd.f32 %v761, %v786
        %v789 = vadd.f32 %v762, %v787
        %s790 = sld [smem:[#allocation8 + $0x91]]
        %v791 = vstv %s790
        %v792 = vmul.f32 %v791, %v782
        %v793 = vmul.f32 %v791, %v783
        %v794 = vadd.f32 %v767, %v792
        %v795 = vadd.f32 %v768, %v793
        %s796 = sld [smem:[#allocation8 + $0x111]]
        %v797 = vstv %s796
        %v798 = vmul.f32 %v797, %v782
        %v799 = vmul.f32 %v797, %v783
        %v800 = vadd.f32 %v773, %v798
        %v801 = vadd.f32 %v774, %v799
        %s802 = sld [smem:[#allocation8 + $0x191]]
        %v803 = vstv %s802
        %v804 = vmul.f32 %v803, %v782
        %v805 = vmul.f32 %v803, %v783
        %v806 = vadd.f32 %v779, %v804
        %v807 = vadd.f32 %v780, %v805
        %s808 = scalar_lea.vmem %s276, 288 [#allocation3]
        %v809 = vld [vmem:[%s808] sm:$0xff]
        %v810 = vld [vmem:[%s808 + $0x8] sm:$0xff]
        %s811 = sld [smem:[#allocation8 + $0x12]]
        %v812 = vstv %s811
        %v813 = vmul.f32 %v812, %v809
        %v814 = vmul.f32 %v812, %v810
        %v815 = vadd.f32 %v788, %v813
        %v816 = vadd.f32 %v789, %v814
        %s817 = sld [smem:[#allocation8 + $0x92]]
        %v818 = vstv %s817
        %v819 = vmul.f32 %v818, %v809
        %v820 = vmul.f32 %v818, %v810
        %v821 = vadd.f32 %v794, %v819
        %v822 = vadd.f32 %v795, %v820
        %s823 = sld [smem:[#allocation8 + $0x112]]
        %v824 = vstv %s823
        %v825 = vmul.f32 %v824, %v809
        %v826 = vmul.f32 %v824, %v810
        %v827 = vadd.f32 %v800, %v825
        %v828 = vadd.f32 %v801, %v826
        %s829 = sld [smem:[#allocation8 + $0x192]]
        %v830 = vstv %s829
        %v831 = vmul.f32 %v830, %v809
        %v832 = vmul.f32 %v830, %v810
        %v833 = vadd.f32 %v806, %v831
        %v834 = vadd.f32 %v807, %v832
        %s835 = scalar_lea.vmem %s276, 304 [#allocation3]
        %v836 = vld [vmem:[%s835] sm:$0xff]
        %v837 = vld [vmem:[%s835 + $0x8] sm:$0xff]
        %s838 = sld [smem:[#allocation8 + $0x13]]
        %v839 = vstv %s838
        %v840 = vmul.f32 %v839, %v836
        %v841 = vmul.f32 %v839, %v837
        %v842 = vadd.f32 %v815, %v840
        %v843 = vadd.f32 %v816, %v841
        %s844 = sld [smem:[#allocation8 + $0x93]]
        %v845 = vstv %s844
        %v846 = vmul.f32 %v845, %v836
        %v847 = vmul.f32 %v845, %v837
        %v848 = vadd.f32 %v821, %v846
        %v849 = vadd.f32 %v822, %v847
        %s850 = sld [smem:[#allocation8 + $0x113]]
        %v851 = vstv %s850
        %v852 = vmul.f32 %v851, %v836
        %v853 = vmul.f32 %v851, %v837
        %v854 = vadd.f32 %v827, %v852
        %v855 = vadd.f32 %v828, %v853
        %s856 = sld [smem:[#allocation8 + $0x193]]
        %v857 = vstv %s856
        %v858 = vmul.f32 %v857, %v836
        %v859 = vmul.f32 %v857, %v837
        %v860 = vadd.f32 %v833, %v858
        %v861 = vadd.f32 %v834, %v859
        %s862 = scalar_lea.vmem %s276, 320 [#allocation3]
        %v863 = vld [vmem:[%s862] sm:$0xff]
        %v864 = vld [vmem:[%s862 + $0x8] sm:$0xff]
        %s865 = sld [smem:[#allocation8 + $0x14]]
        %v866 = vstv %s865
        %v867 = vmul.f32 %v866, %v863
        %v868 = vmul.f32 %v866, %v864
        %v869 = vadd.f32 %v842, %v867
        %v870 = vadd.f32 %v843, %v868
        %s871 = sld [smem:[#allocation8 + $0x94]]
        %v872 = vstv %s871
        %v873 = vmul.f32 %v872, %v863
        %v874 = vmul.f32 %v872, %v864
        %v875 = vadd.f32 %v848, %v873
        %v876 = vadd.f32 %v849, %v874
        %s877 = sld [smem:[#allocation8 + $0x114]]
        %v878 = vstv %s877
        %v879 = vmul.f32 %v878, %v863
        %v880 = vmul.f32 %v878, %v864
        %v881 = vadd.f32 %v854, %v879
        %v882 = vadd.f32 %v855, %v880
        %s883 = sld [smem:[#allocation8 + $0x194]]
        %v884 = vstv %s883
        %v885 = vmul.f32 %v884, %v863
        %v886 = vmul.f32 %v884, %v864
        %v887 = vadd.f32 %v860, %v885
        %v888 = vadd.f32 %v861, %v886
        %s889 = scalar_lea.vmem %s276, 336 [#allocation3]
        %v890 = vld [vmem:[%s889] sm:$0xff]
        %v891 = vld [vmem:[%s889 + $0x8] sm:$0xff]
        %s892 = sld [smem:[#allocation8 + $0x15]]
        %v893 = vstv %s892
        %v894 = vmul.f32 %v893, %v890
        %v895 = vmul.f32 %v893, %v891
        %v896 = vadd.f32 %v869, %v894
        %v897 = vadd.f32 %v870, %v895
        %s898 = sld [smem:[#allocation8 + $0x95]]
        %v899 = vstv %s898
        %v900 = vmul.f32 %v899, %v890
        %v901 = vmul.f32 %v899, %v891
        %v902 = vadd.f32 %v875, %v900
        %v903 = vadd.f32 %v876, %v901
        %s904 = sld [smem:[#allocation8 + $0x115]]
        %v905 = vstv %s904
        %v906 = vmul.f32 %v905, %v890
        %v907 = vmul.f32 %v905, %v891
        %v908 = vadd.f32 %v881, %v906
        %v909 = vadd.f32 %v882, %v907
        %s910 = sld [smem:[#allocation8 + $0x195]]
        %v911 = vstv %s910
        %v912 = vmul.f32 %v911, %v890
        %v913 = vmul.f32 %v911, %v891
        %v914 = vadd.f32 %v887, %v912
        %v915 = vadd.f32 %v888, %v913
        %s916 = scalar_lea.vmem %s276, 352 [#allocation3]
        %v917 = vld [vmem:[%s916] sm:$0xff]
        %v918 = vld [vmem:[%s916 + $0x8] sm:$0xff]
        %s919 = sld [smem:[#allocation8 + $0x16]]
        %v920 = vstv %s919
        %v921 = vmul.f32 %v920, %v917
        %v922 = vmul.f32 %v920, %v918
        %v923 = vadd.f32 %v896, %v921
        %v924 = vadd.f32 %v897, %v922
        %s925 = sld [smem:[#allocation8 + $0x96]]
        %v926 = vstv %s925
        %v927 = vmul.f32 %v926, %v917
        %v928 = vmul.f32 %v926, %v918
        %v929 = vadd.f32 %v902, %v927
        %v930 = vadd.f32 %v903, %v928
        %s931 = sld [smem:[#allocation8 + $0x116]]
        %v932 = vstv %s931
        %v933 = vmul.f32 %v932, %v917
        %v934 = vmul.f32 %v932, %v918
        %v935 = vadd.f32 %v908, %v933
        %v936 = vadd.f32 %v909, %v934
        %s937 = sld [smem:[#allocation8 + $0x196]]
        %v938 = vstv %s937
        %v939 = vmul.f32 %v938, %v917
        %v940 = vmul.f32 %v938, %v918
        %v941 = vadd.f32 %v914, %v939
        %v942 = vadd.f32 %v915, %v940
        %s943 = scalar_lea.vmem %s276, 368 [#allocation3]
        %v944 = vld [vmem:[%s943] sm:$0xff]
        %v945 = vld [vmem:[%s943 + $0x8] sm:$0xff]
        %s946 = sld [smem:[#allocation8 + $0x17]]
        %v947 = vstv %s946
        %v948 = vmul.f32 %v947, %v944
        %v949 = vmul.f32 %v947, %v945
        %v950 = vadd.f32 %v923, %v948
        %v951 = vadd.f32 %v924, %v949
        %s952 = sld [smem:[#allocation8 + $0x97]]
        %v953 = vstv %s952
        %v954 = vmul.f32 %v953, %v944
        %v955 = vmul.f32 %v953, %v945
        %v956 = vadd.f32 %v929, %v954
        %v957 = vadd.f32 %v930, %v955
        %s958 = sld [smem:[#allocation8 + $0x117]]
        %v959 = vstv %s958
        %v960 = vmul.f32 %v959, %v944
        %v961 = vmul.f32 %v959, %v945
        %v962 = vadd.f32 %v935, %v960
        %v963 = vadd.f32 %v936, %v961
        %s964 = sld [smem:[#allocation8 + $0x197]]
        %v965 = vstv %s964
        %v966 = vmul.f32 %v965, %v944
        %v967 = vmul.f32 %v965, %v945
        %v968 = vadd.f32 %v941, %v966
        %v969 = vadd.f32 %v942, %v967
        %s970 = scalar_lea.vmem %s276, 384 [#allocation3]
        %v971 = vld [vmem:[%s970] sm:$0xff]
        %v972 = vld [vmem:[%s970 + $0x8] sm:$0xff]
        %s973 = sld [smem:[#allocation8 + $0x18]]
        %v974 = vstv %s973
        %v975 = vmul.f32 %v974, %v971
        %v976 = vmul.f32 %v974, %v972
        %v977 = vadd.f32 %v950, %v975
        %v978 = vadd.f32 %v951, %v976
        %s979 = sld [smem:[#allocation8 + $0x98]]
        %v980 = vstv %s979
        %v981 = vmul.f32 %v980, %v971
        %v982 = vmul.f32 %v980, %v972
        %v983 = vadd.f32 %v956, %v981
        %v984 = vadd.f32 %v957, %v982
        %s985 = sld [smem:[#allocation8 + $0x118]]
        %v986 = vstv %s985
        %v987 = vmul.f32 %v986, %v971
        %v988 = vmul.f32 %v986, %v972
        %v989 = vadd.f32 %v962, %v987
        %v990 = vadd.f32 %v963, %v988
        %s991 = sld [smem:[#allocation8 + $0x198]]
        %v992 = vstv %s991
        %v993 = vmul.f32 %v992, %v971
        %v994 = vmul.f32 %v992, %v972
        %v995 = vadd.f32 %v968, %v993
        %v996 = vadd.f32 %v969, %v994
        %s997 = scalar_lea.vmem %s276, 400 [#allocation3]
        %v998 = vld [vmem:[%s997] sm:$0xff]
        %v999 = vld [vmem:[%s997 + $0x8] sm:$0xff]
        %s1000 = sld [smem:[#allocation8 + $0x19]]
        %v1001 = vstv %s1000
        %v1002 = vmul.f32 %v1001, %v998
        %v1003 = vmul.f32 %v1001, %v999
        %v1004 = vadd.f32 %v977, %v1002
        %v1005 = vadd.f32 %v978, %v1003
        %s1006 = sld [smem:[#allocation8 + $0x99]]
        %v1007 = vstv %s1006
        %v1008 = vmul.f32 %v1007, %v998
        %v1009 = vmul.f32 %v1007, %v999
        %v1010 = vadd.f32 %v983, %v1008
        %v1011 = vadd.f32 %v984, %v1009
        %s1012 = sld [smem:[#allocation8 + $0x119]]
        %v1013 = vstv %s1012
        %v1014 = vmul.f32 %v1013, %v998
        %v1015 = vmul.f32 %v1013, %v999
        %v1016 = vadd.f32 %v989, %v1014
        %v1017 = vadd.f32 %v990, %v1015
        %s1018 = sld [smem:[#allocation8 + $0x199]]
        %v1019 = vstv %s1018
        %v1020 = vmul.f32 %v1019, %v998
        %v1021 = vmul.f32 %v1019, %v999
        %v1022 = vadd.f32 %v995, %v1020
        %v1023 = vadd.f32 %v996, %v1021
        %s1024 = scalar_lea.vmem %s276, 416 [#allocation3]
        %v1025 = vld [vmem:[%s1024] sm:$0xff]
        %v1026 = vld [vmem:[%s1024 + $0x8] sm:$0xff]
        %s1027 = sld [smem:[#allocation8 + $0x1a]]
        %v1028 = vstv %s1027
        %v1029 = vmul.f32 %v1028, %v1025
        %v1030 = vmul.f32 %v1028, %v1026
        %v1031 = vadd.f32 %v1004, %v1029
        %v1032 = vadd.f32 %v1005, %v1030
        %s1033 = sld [smem:[#allocation8 + $0x9a]]
        %v1034 = vstv %s1033
        %v1035 = vmul.f32 %v1034, %v1025
        %v1036 = vmul.f32 %v1034, %v1026
        %v1037 = vadd.f32 %v1010, %v1035
        %v1038 = vadd.f32 %v1011, %v1036
        %s1039 = sld [smem:[#allocation8 + $0x11a]]
        %v1040 = vstv %s1039
        %v1041 = vmul.f32 %v1040, %v1025
        %v1042 = vmul.f32 %v1040, %v1026
        %v1043 = vadd.f32 %v1016, %v1041
        %v1044 = vadd.f32 %v1017, %v1042
        %s1045 = sld [smem:[#allocation8 + $0x19a]]
        %v1046 = vstv %s1045
        %v1047 = vmul.f32 %v1046, %v1025
        %v1048 = vmul.f32 %v1046, %v1026
        %v1049 = vadd.f32 %v1022, %v1047
        %v1050 = vadd.f32 %v1023, %v1048
        %s1051 = scalar_lea.vmem %s276, 432 [#allocation3]
        %v1052 = vld [vmem:[%s1051] sm:$0xff]
        %v1053 = vld [vmem:[%s1051 + $0x8] sm:$0xff]
        %s1054 = sld [smem:[#allocation8 + $0x1b]]
        %v1055 = vstv %s1054
        %v1056 = vmul.f32 %v1055, %v1052
        %v1057 = vmul.f32 %v1055, %v1053
        %v1058 = vadd.f32 %v1031, %v1056
        %v1059 = vadd.f32 %v1032, %v1057
        %s1060 = sld [smem:[#allocation8 + $0x9b]]
        %v1061 = vstv %s1060
        %v1062 = vmul.f32 %v1061, %v1052
        %v1063 = vmul.f32 %v1061, %v1053
        %v1064 = vadd.f32 %v1037, %v1062
        %v1065 = vadd.f32 %v1038, %v1063
        %s1066 = sld [smem:[#allocation8 + $0x11b]]
        %v1067 = vstv %s1066
        %v1068 = vmul.f32 %v1067, %v1052
        %v1069 = vmul.f32 %v1067, %v1053
        %v1070 = vadd.f32 %v1043, %v1068
        %v1071 = vadd.f32 %v1044, %v1069
        %s1072 = sld [smem:[#allocation8 + $0x19b]]
        %v1073 = vstv %s1072
        %v1074 = vmul.f32 %v1073, %v1052
        %v1075 = vmul.f32 %v1073, %v1053
        %v1076 = vadd.f32 %v1049, %v1074
        %v1077 = vadd.f32 %v1050, %v1075
        %s1078 = scalar_lea.vmem %s276, 448 [#allocation3]
        %v1079 = vld [vmem:[%s1078] sm:$0xff]
        %v1080 = vld [vmem:[%s1078 + $0x8] sm:$0xff]
        %s1081 = sld [smem:[#allocation8 + $0x1c]]
        %v1082 = vstv %s1081
        %v1083 = vmul.f32 %v1082, %v1079
        %v1084 = vmul.f32 %v1082, %v1080
        %v1085 = vadd.f32 %v1058, %v1083
        %v1086 = vadd.f32 %v1059, %v1084
        %s1087 = sld [smem:[#allocation8 + $0x9c]]
        %v1088 = vstv %s1087
        %v1089 = vmul.f32 %v1088, %v1079
        %v1090 = vmul.f32 %v1088, %v1080
        %v1091 = vadd.f32 %v1064, %v1089
        %v1092 = vadd.f32 %v1065, %v1090
        %s1093 = sld [smem:[#allocation8 + $0x11c]]
        %v1094 = vstv %s1093
        %v1095 = vmul.f32 %v1094, %v1079
        %v1096 = vmul.f32 %v1094, %v1080
        %v1097 = vadd.f32 %v1070, %v1095
        %v1098 = vadd.f32 %v1071, %v1096
        %s1099 = sld [smem:[#allocation8 + $0x19c]]
        %v1100 = vstv %s1099
        %v1101 = vmul.f32 %v1100, %v1079
        %v1102 = vmul.f32 %v1100, %v1080
        %v1103 = vadd.f32 %v1076, %v1101
        %v1104 = vadd.f32 %v1077, %v1102
        %s1105 = scalar_lea.vmem %s276, 464 [#allocation3]
        %v1106 = vld [vmem:[%s1105] sm:$0xff]
        %v1107 = vld [vmem:[%s1105 + $0x8] sm:$0xff]
        %s1108 = sld [smem:[#allocation8 + $0x1d]]
        %v1109 = vstv %s1108
        %v1110 = vmul.f32 %v1109, %v1106
        %v1111 = vmul.f32 %v1109, %v1107
        %v1112 = vadd.f32 %v1085, %v1110
        %v1113 = vadd.f32 %v1086, %v1111
        %s1114 = sld [smem:[#allocation8 + $0x9d]]
        %v1115 = vstv %s1114
        %v1116 = vmul.f32 %v1115, %v1106
        %v1117 = vmul.f32 %v1115, %v1107
        %v1118 = vadd.f32 %v1091, %v1116
        %v1119 = vadd.f32 %v1092, %v1117
        %s1120 = sld [smem:[#allocation8 + $0x11d]]
        %v1121 = vstv %s1120
        %v1122 = vmul.f32 %v1121, %v1106
        %v1123 = vmul.f32 %v1121, %v1107
        %v1124 = vadd.f32 %v1097, %v1122
        %v1125 = vadd.f32 %v1098, %v1123
        %s1126 = sld [smem:[#allocation8 + $0x19d]]
        %v1127 = vstv %s1126
        %v1128 = vmul.f32 %v1127, %v1106
        %v1129 = vmul.f32 %v1127, %v1107
        %v1130 = vadd.f32 %v1103, %v1128
        %v1131 = vadd.f32 %v1104, %v1129
        %s1132 = scalar_lea.vmem %s276, 480 [#allocation3]
        %v1133 = vld [vmem:[%s1132] sm:$0xff]
        %v1134 = vld [vmem:[%s1132 + $0x8] sm:$0xff]
        %s1135 = sld [smem:[#allocation8 + $0x1e]]
        %v1136 = vstv %s1135
        %v1137 = vmul.f32 %v1136, %v1133
        %v1138 = vmul.f32 %v1136, %v1134
        %v1139 = vadd.f32 %v1112, %v1137
        %v1140 = vadd.f32 %v1113, %v1138
        %s1141 = sld [smem:[#allocation8 + $0x9e]]
        %v1142 = vstv %s1141
        %v1143 = vmul.f32 %v1142, %v1133
        %v1144 = vmul.f32 %v1142, %v1134
        %v1145 = vadd.f32 %v1118, %v1143
        %v1146 = vadd.f32 %v1119, %v1144
        %s1147 = sld [smem:[#allocation8 + $0x11e]]
        %v1148 = vstv %s1147
        %v1149 = vmul.f32 %v1148, %v1133
        %v1150 = vmul.f32 %v1148, %v1134
        %v1151 = vadd.f32 %v1124, %v1149
        %v1152 = vadd.f32 %v1125, %v1150
        %s1153 = sld [smem:[#allocation8 + $0x19e]]
        %v1154 = vstv %s1153
        %v1155 = vmul.f32 %v1154, %v1133
        %v1156 = vmul.f32 %v1154, %v1134
        %v1157 = vadd.f32 %v1130, %v1155
        %v1158 = vadd.f32 %v1131, %v1156
        %s1159 = scalar_lea.vmem %s276, 496 [#allocation3]
        %v1160 = vld [vmem:[%s1159] sm:$0xff]
        %v1161 = vld [vmem:[%s1159 + $0x8] sm:$0xff]
        %s1162 = sld [smem:[#allocation8 + $0x1f]]
        %v1163 = vstv %s1162
        %v1164 = vmul.f32 %v1163, %v1160
        %v1165 = vmul.f32 %v1163, %v1161
        %v1166 = vadd.f32 %v1139, %v1164
        %v1167 = vadd.f32 %v1140, %v1165
        %s1168 = sld [smem:[#allocation8 + $0x9f]]
        %v1169 = vstv %s1168
        %v1170 = vmul.f32 %v1169, %v1160
        %v1171 = vmul.f32 %v1169, %v1161
        %v1172 = vadd.f32 %v1145, %v1170
        %v1173 = vadd.f32 %v1146, %v1171
        %s1174 = sld [smem:[#allocation8 + $0x11f]]
        %v1175 = vstv %s1174
        %v1176 = vmul.f32 %v1175, %v1160
        %v1177 = vmul.f32 %v1175, %v1161
        %v1178 = vadd.f32 %v1151, %v1176
        %v1179 = vadd.f32 %v1152, %v1177
        %s1180 = sld [smem:[#allocation8 + $0x19f]]
        %v1181 = vstv %s1180
        %v1182 = vmul.f32 %v1181, %v1160
        %v1183 = vmul.f32 %v1181, %v1161
        %v1184 = vadd.f32 %v1157, %v1182
        %v1185 = vadd.f32 %v1158, %v1183
        %vm1186 = vcmp.ge.f32.partialorder %v1166, 0.0
        %vm1187 = vcmp.ge.f32.partialorder %v1167, 0.0
        %v1188 = vstv %s314
        %v1189 = vmul.f32 %v1188, %v1166
        %v1190 = vmul.f32 %v1188, %v1167
        %v1191 = vsel %vm1186, %v1166, %v1189
        %v1192 = vsel %vm1187, %v1167, %v1190
        %vm1193 = vcmp.ge.f32.partialorder %v1172, 0.0
        %vm1194 = vcmp.ge.f32.partialorder %v1173, 0.0
        %v1195 = vmul.f32 %v1188, %v1172
        %v1196 = vmul.f32 %v1188, %v1173
        %v1197 = vsel %vm1193, %v1172, %v1195
        %v1198 = vsel %vm1194, %v1173, %v1196
        %vm1199 = vcmp.ge.f32.partialorder %v1178, 0.0
        %vm1200 = vcmp.ge.f32.partialorder %v1179, 0.0
        %v1201 = vmul.f32 %v1188, %v1178
        %v1202 = vmul.f32 %v1188, %v1179
        %v1203 = vsel %vm1199, %v1178, %v1201
        %v1204 = vsel %vm1200, %v1179, %v1202
        %vm1205 = vcmp.ge.f32.partialorder %v1184, 0.0
        %vm1206 = vcmp.ge.f32.partialorder %v1185, 0.0
        %v1207 = vmul.f32 %v1188, %v1184
        %v1208 = vmul.f32 %v1188, %v1185
        %v1209 = vsel %vm1205, %v1184, %v1207
        %v1210 = vsel %vm1206, %v1185, %v1208
        %v1211 = vmul.f32 %v1191, %v1191
        %v1212 = vmul.f32 %v1192, %v1192
        %v1213 = vadd.f32 %v1191, %v1197
        %v1214 = vadd.f32 %v1192, %v1198
        %v1215 = vmul.f32 %v1197, %v1197
        %v1216 = vmul.f32 %v1198, %v1198
        %v1217 = vadd.f32 %v1211, %v1215
        %v1218 = vadd.f32 %v1212, %v1216
        %v1219 = vadd.f32 %v1213, %v1203
        %v1220 = vadd.f32 %v1214, %v1204
        %v1221 = vmul.f32 %v1203, %v1203
        %v1222 = vmul.f32 %v1204, %v1204
        %v1223 = vadd.f32 %v1217, %v1221
        %v1224 = vadd.f32 %v1218, %v1222
        %v1225 = vadd.f32 %v1219, %v1209
        %v1226 = vadd.f32 %v1220, %v1210
        %v1227 = vmul.f32 %v1209, %v1209
        %v1228 = vmul.f32 %v1210, %v1210
        %v1229 = vadd.f32 %v1223, %v1227
        %v1230 = vadd.f32 %v1224, %v1228
        %vm1231 = vcmask 7168
        %v1232 = vsel %vm1231, %v1226, 0.0
        %v1233 = vadd.f32 %v1225, %v1232
        %1234 = vadd.xlane.f32.xlu0 %v1233
        %v1235 = vpop.xlane.xlu0 %1234
        %v1236 = vsel %vm1231, %v1230, 0.0
        %v1237 = vadd.f32 %v1229, %v1236
        %1238 = vadd.xlane.f32.xlu0 %v1237
        %v1239 = vpop.xlane.xlu0 %1238
        %v1240 = vmul.f32 %v1235, 0.0019379845
        %v1241 = vmul.f32 %v1239, 0.0019379845
        %v1242 = vmul.f32 %v1240, %v1240
        %v1243 = vsub.f32 %v1241, %v1242
        %v1244 = vmax.f32 %v1243, 0.0
        %v1245 = vadd.f32 %v1244, 1e-05
        %v1246 = vrsqrt.pop %v1245
        %v1247 = vld [vmem:[%s4] ss:$4 sm:$0x3]
        %v1248 = vld [vmem:[%s5] ss:$4 sm:$0x3]
        %v1249 = vsub.f32 %v1191, %v1240
        %v1250 = vsub.f32 %v1192, %v1240
        %v1251 = vmul.f32 %v1249, %v1246
        %v1252 = vmul.f32 %v1250, %v1246
        %v1254 = vlaneseq
        %v1255 = vshrl.u32 %v1254, 7
        %v1256 = vsub.s32 0, %v1255
        %v1257 = vrot.slane %v1247, %v1256
        %v1258 = vlaneseq
        %v1259 = vshrl.u32 %v1258, 7
        %v1260 = vsub.s32 1, %v1259
        %v1261 = vrot.slane %v1247, %v1260
        %v1264 = vmul.f32 %v1251, %v1257
        %v1265 = vmul.f32 %v1252, %v1261
        %v1267 = vlaneseq
        %v1268 = vshrl.u32 %v1267, 7
        %v1269 = vsub.s32 0, %v1268
        %v1270 = vrot.slane %v1248, %v1269
        %v1271 = vlaneseq
        %v1272 = vshrl.u32 %v1271, 7
        %v1273 = vsub.s32 1, %v1272
        %v1274 = vrot.slane %v1248, %v1273
        %v1277 = vadd.f32 %v1264, %v1270
        %v1278 = vadd.f32 %v1265, %v1274
        %1279 = vst [vmem:[%s313] sm:$0xff] %v1277
        %1280 = vst.msk [vmem:[%s313 + $0x8] sm:$0xff] %vm1231, %v1278
        %s1281 = scalar_lea.vmem %s4, 1
        %v1282 = vld [vmem:[%s1281] ss:$4 sm:$0x3]
        %s1283 = scalar_lea.vmem %s5, 1
        %v1284 = vld [vmem:[%s1283] ss:$4 sm:$0x3]
        %v1285 = vsub.f32 %v1197, %v1240
        %v1286 = vsub.f32 %v1198, %v1240
        %v1287 = vmul.f32 %v1285, %v1246
        %v1288 = vmul.f32 %v1286, %v1246
        %v1290 = vlaneseq
        %v1291 = vshrl.u32 %v1290, 7
        %v1292 = vsub.s32 0, %v1291
        %v1293 = vrot.slane %v1282, %v1292
        %v1294 = vlaneseq
        %v1295 = vshrl.u32 %v1294, 7
        %v1296 = vsub.s32 1, %v1295
        %v1297 = vrot.slane %v1282, %v1296
        %v1300 = vmul.f32 %v1287, %v1293
        %v1301 = vmul.f32 %v1288, %v1297
        %v1303 = vlaneseq
        %v1304 = vshrl.u32 %v1303, 7
        %v1305 = vsub.s32 0, %v1304
        %v1306 = vrot.slane %v1284, %v1305
        %v1307 = vlaneseq
        %v1308 = vshrl.u32 %v1307, 7
        %v1309 = vsub.s32 1, %v1308
        %v1310 = vrot.slane %v1284, %v1309
        %v1313 = vadd.f32 %v1300, %v1306
        %v1314 = vadd.f32 %v1301, %v1310
        %s1315 = scalar_lea.vmem %s313, 16 [#allocation10]
        %1316 = vst [vmem:[%s1315] sm:$0xff] %v1313
        %1317 = vst.msk [vmem:[%s1315 + $0x8] sm:$0xff] %vm1231, %v1314
        %s1318 = scalar_lea.vmem %s4, 2
        %v1319 = vld [vmem:[%s1318] ss:$4 sm:$0x3]
        %s1320 = scalar_lea.vmem %s5, 2
        %v1321 = vld [vmem:[%s1320] ss:$4 sm:$0x3]
        %v1322 = vsub.f32 %v1203, %v1240
        %v1323 = vsub.f32 %v1204, %v1240
        %v1324 = vmul.f32 %v1322, %v1246
        %v1325 = vmul.f32 %v1323, %v1246
        %v1327 = vlaneseq
        %v1328 = vshrl.u32 %v1327, 7
        %v1329 = vsub.s32 0, %v1328
        %v1330 = vrot.slane %v1319, %v1329
        %v1331 = vlaneseq
        %v1332 = vshrl.u32 %v1331, 7
        %v1333 = vsub.s32 1, %v1332
        %v1334 = vrot.slane %v1319, %v1333
        %v1337 = vmul.f32 %v1324, %v1330
        %v1338 = vmul.f32 %v1325, %v1334
        %v1340 = vlaneseq
        %v1341 = vshrl.u32 %v1340, 7
        %v1342 = vsub.s32 0, %v1341
        %v1343 = vrot.slane %v1321, %v1342
        %v1344 = vlaneseq
        %v1345 = vshrl.u32 %v1344, 7
        %v1346 = vsub.s32 1, %v1345
        %v1347 = vrot.slane %v1321, %v1346
        %v1350 = vadd.f32 %v1337, %v1343
        %v1351 = vadd.f32 %v1338, %v1347
        %s1352 = scalar_lea.vmem %s313, 32 [#allocation10]
        %1353 = vst [vmem:[%s1352] sm:$0xff] %v1350
        %1354 = vst.msk [vmem:[%s1352 + $0x8] sm:$0xff] %vm1231, %v1351
        %s1355 = scalar_lea.vmem %s4, 3
        %v1356 = vld [vmem:[%s1355] ss:$4 sm:$0x3]
        %s1357 = scalar_lea.vmem %s5, 3
        %v1358 = vld [vmem:[%s1357] ss:$4 sm:$0x3]
        %v1359 = vsub.f32 %v1209, %v1240
        %v1360 = vsub.f32 %v1210, %v1240
        %v1361 = vmul.f32 %v1359, %v1246
        %v1362 = vmul.f32 %v1360, %v1246
        %v1364 = vlaneseq
        %v1365 = vshrl.u32 %v1364, 7
        %v1366 = vsub.s32 0, %v1365
        %v1367 = vrot.slane %v1356, %v1366
        %v1368 = vlaneseq
        %v1369 = vshrl.u32 %v1368, 7
        %v1370 = vsub.s32 1, %v1369
        %v1371 = vrot.slane %v1356, %v1370
        %v1374 = vmul.f32 %v1361, %v1367
        %v1375 = vmul.f32 %v1362, %v1371
        %v1377 = vlaneseq
        %v1378 = vshrl.u32 %v1377, 7
        %v1379 = vsub.s32 0, %v1378
        %v1380 = vrot.slane %v1358, %v1379
        %v1381 = vlaneseq
        %v1382 = vshrl.u32 %v1381, 7
        %v1383 = vsub.s32 1, %v1382
        %v1384 = vrot.slane %v1358, %v1383
        %v1387 = vadd.f32 %v1374, %v1380
        %v1388 = vadd.f32 %v1375, %v1384
        %s1389 = scalar_lea.vmem %s313, 48 [#allocation10]
        %1390 = vst [vmem:[%s1389] sm:$0xff] %v1387
        %1391 = vst.msk [vmem:[%s1389 + $0x8] sm:$0xff] %vm1231, %v1388
        %s1392 = sand.u32 %s181, 1
        %s1393 = scalar_lea.sflag [#allocation5], %s1392
        %s1394 = sand.u32 %s181, 1
        %s1395 = smul.addr %s1394, 64
        %s1396 = scalar_lea.vmem [#allocation10], %s1395
        // Predicated region
        $region57: #{tpu_custom_call.1} parent=43 // pred_check
          %p1397 = pneg %p191
        $region58: #{tpu_custom_call.1} parent=43 // pred_check_branch
          %1399 = sbr.rel (%p1397) target = $region60
        $region59: #{tpu_custom_call.1} parent=43 // pred_region
          %s1401 = ssub.s32 1024, 1024
          %1402 = vsyncadd %s1393, %s1401
          %s1403 = smul.addr %s31, 2
          %s1404 = smul.addr %s30, 8
          %s1405 = sadd.s32 %s1403, %s1404
          %s1406 = smul.addr %s1405, 128
          %s1407 = scalar_lea.hbm %s6, %s1406
          %s1408 = sshll.u32 %s1396, 4
          %s1409 = int_to_ptr.vmem [resolvable:$true] %s1408
          %1414 = dma.vmem_to_hbm [thread:$0]  %s1409, 1024, %s1407, %s1393, 256, 256, 16
        $region60: #{tpu_custom_call.1} parent=43 // pred_fallthru
          _
      $region44: #{tpu_custom_call.1} parent=5 // pred_fallthru
        _
      %p1415 = scmp.le.s32.totalorder 2, %s21
      // Predicated region
      $region61: #{tpu_custom_call.1} parent=5 // pred_check
        %p1416 = pneg %p1415
      $region62: #{tpu_custom_call.1} parent=5 // pred_check_branch
        %1418 = sbr.rel (%p1416) target = $region64
      $region63: #{tpu_custom_call.1} parent=5 // pred_region
        %s1419 = ssub.s32 %s21, 2
        // Predicated region
        $region65: #{tpu_custom_call.1} parent=63 // pred_check
          %p1420 = pneg %p197
        $region66: #{tpu_custom_call.1} parent=63 // pred_check_branch
          %1422 = sbr.rel (%p1420) target = $region68
        $region67: #{tpu_custom_call.1} parent=63 // pred_region
          %s1423 = sand.u32 %s182, 1
          %s1424 = scalar_lea.sflag [#allocation5], %s1423
          %s1425 = sand.u32 %s182, 1
          %s1426 = smul.addr %s1425, 64
          %s1427 = scalar_lea.vmem [#allocation10], %s1426
          %1428 = dma.done %s1424, 1024
        $region68: #{tpu_custom_call.1} parent=63 // pred_fallthru
          _
      $region64: #{tpu_custom_call.1} parent=5 // pred_fallthru
        _
    $region6: #{tpu_custom_call.1} parent=1 // loop_footer
      %s25 = sadd.s32 1, %s21
    $region7: #{tpu_custom_call.1} parent=1 // loop_footer_branch
      %20 = sbr.rel target = $region3
    $region8: #{tpu_custom_call.1} parent=1 // loop_exit
      _
    %1429 = vsyncpa [#allocation4], 1
    %s1430 = scalar_lea.sflag [#allocation4], 1
    %1431 = vsyncpa %s1430, 1
    %1432 = vsyncpa [#allocation5], 1
    %s1433 = scalar_lea.sflag [#allocation5], 1
    %1434 = vsyncpa %s1433, 1
    %1435 = vsyncpa [#allocation6], 1
    %s1436 = scalar_lea.sflag [#allocation6], 1
    %1437 = vsyncpa %s1436, 1
    %1438 = vsyncpa [#allocation7], 1
    %s1439 = scalar_lea.sflag [#allocation7], 1
    %1440 = vsyncpa %s1439, 1

</llo_original>
